<compile_context>
chip_gen: v5e
topology: v5e:2x2
jax: 0.10.0
libtpu: 0.0.40
codegen_flags: <defaults>
</compile_context>

<pallas_src>
import jax
import jax.numpy as jnp
from jax import lax
from jax.experimental import pallas as pl
from jax.experimental.pallas import tpu as pltpu

EPS = 1e-5          # nn.InstanceNorm2d default eps
NEG_SLOPE = 0.2     # LeakyReLU negative_slope


def _pad_hw1(x):
    """Zero-pad the spatial dims of (B, H, W, C) by 1 on each side (value-level)."""
    B, H, W, C = x.shape
    zrow = jnp.zeros((B, 1, W, C), x.dtype)
    x = jnp.concatenate([zrow, x, zrow], axis=1)            # (B, H+2, W,   C)
    zcol = jnp.zeros((B, H + 2, 1, C), x.dtype)
    return jnp.concatenate([zcol, x, zcol], axis=2)         # (B, H+2, W+2, C)


def _conv3x3(x_bhwc_bf16, w_ref):
    """3x3 same-convolution as a single im2col MXU matmul.

    x_bhwc_bf16: (B, H, W, C) bf16
    w_ref:       (9*C, Cout)  bf16 ref, rows ordered ((dy*3 + dx)*C + c)
    returns      (B*H*W, Cout) f32
    """
    B, H, W, C = x_bhwc_bf16.shape
    xp = _pad_hw1(x_bhwc_bf16)                               # (B, H+2, W+2, C)
    pieces = [xp[:, dy:dy + H, dx:dx + W, :]                 # each (B, H, W, C)
              for dy in range(3) for dx in range(3)]
    patches = jnp.concatenate(pieces, axis=-1)               # (B, H, W, 9C)
    patches = patches.reshape(B * H * W, 9 * C)              # lane dim unchanged
    return jnp.dot(patches, w_ref[...],
                   preferred_element_type=jnp.float32)       # (B*H*W, Cout) f32


def _instance_norm_leaky_relu(a):
    """Per-image, per-channel instance norm over H*W + LeakyReLU(0.2).

    a: (B, H*W, C) float32.  One-pass stats: var = E[x^2] - mean^2 (biased,
    matching PyTorch InstanceNorm2d).  All element-wise math stays in f32.
    """
    inv_n = 1.0 / a.shape[1]
    mean = jnp.sum(a, axis=1, keepdims=True) * inv_n
    mean_sq = jnp.sum(a * a, axis=1, keepdims=True) * inv_n
    var = mean_sq - mean * mean
    y = (a - mean) * lax.rsqrt(var + EPS)
    return jnp.where(y >= 0.0, y, NEG_SLOPE * y)


def conv_block_kernel(x_ref, w1_ref, w2_ref, out_ref):
    # x_ref:  (B, H, W, Cin)   bf16  (NHWC block, B = batch_tile images)
    # w1_ref: (9*Cin,  Cout)   bf16
    # w2_ref: (9*Cout, Cout)   bf16
    # out_ref:(B, H*W, Cout)   f32
    B, H, W, _ = x_ref.shape
    Cout = w1_ref.shape[1]
    HW = H * W

    # ---- conv1: single bf16 im2col matmul, f32 accumulation ----
    acc1 = _conv3x3(x_ref[...], w1_ref)                      # (B*HW, Cout) f32
    a1 = _instance_norm_leaky_relu(acc1.reshape(B, HW, Cout))
    # Dropout2d: identity in inference mode.

    # ---- conv2 ----
    a1_bhwc = a1.reshape(B, H, W, Cout).astype(jnp.bfloat16)
    acc2 = _conv3x3(a1_bhwc, w2_ref)                         # (B*HW, Cout) f32
    a2 = _instance_norm_leaky_relu(acc2.reshape(B, HW, Cout))
    # Dropout2d: identity in inference mode.

    out_ref[...] = a2.astype(out_ref.dtype)


def _pick_batch_tile(N, H, W, Cin, Cout, vmem_budget_bytes=8 * 1024 * 1024):
    """Images per grid step: as many as fit a conservative VMEM budget, but keep
    at least two grid steps when N allows it (pipelining + v7x's 2 TensorCores)."""
    lane = 128
    per_image = H * W * lane * (2 * 2    # in block, bf16, double buffered
                                + 4 * 2  # out block, f32, double buffered
                                + 2 * 2  # bf16 im2col patches (conv1 + conv2)
                                + 4 * 3)  # f32 acc / normalized intermediates
    bt = max(1, min(N, vmem_budget_bytes // max(per_image, 1)))
    if N > 1:
        bt = min(bt, max(1, N // 2))
    while N % bt:
        bt -= 1
    return bt


def conv_block(x_nchw, w1, w2, *, batch_tile=None):
    """ConvBlock forward (eval mode).

    x_nchw: (N, Cin, H, W)    — PyTorch layout
    w1:     (Cout, Cin, 3, 3) — PyTorch Conv2d weight layout
    w2:     (Cout, Cout, 3, 3)
    returns (N, Cout, H, W)
    """
    N, Cin, H, W = x_nchw.shape
    Cout = w1.shape[0]
    if W % 8 != 0:
        raise ValueError(f"conv_block kernel assumes W % 8 == 0 (sublane tiling); got W={W}")

    # Layout plumbing in the wrapper (pure XLA, no extra padded copy of x):
    # NCHW -> NHWC fused with the bf16 cast; weights repacked to (9*C, Cout)
    # with row index (dy*3 + dx)*C + c, matching the in-kernel im2col order.
    x_nhwc = jnp.transpose(x_nchw, (0, 2, 3, 1)).astype(jnp.bfloat16)
    w1_k = jnp.transpose(w1, (2, 3, 1, 0)).reshape(9 * Cin, Cout).astype(jnp.bfloat16)
    w2_k = jnp.transpose(w2, (2, 3, 1, 0)).reshape(9 * Cout, Cout).astype(jnp.bfloat16)

    if batch_tile is None:
        batch_tile = _pick_batch_tile(N, H, W, Cin, Cout)
    grid = (N // batch_tile,)

    out_flat = pl.pallas_call(
        conv_block_kernel,
        out_shape=jax.ShapeDtypeStruct((N, H * W, Cout), x_nchw.dtype),
        grid_spec=pltpu.PrefetchScalarGridSpec(
            num_scalar_prefetch=0,
            grid=grid,
            in_specs=[
                pl.BlockSpec((batch_tile, H, W, Cin), lambda n: (n, 0, 0, 0)),
                pl.BlockSpec((9 * Cin, Cout), lambda n: (0, 0)),
                pl.BlockSpec((9 * Cout, Cout), lambda n: (0, 0)),
            ],
            out_specs=pl.BlockSpec((batch_tile, H * W, Cout), lambda n: (n, 0, 0)),
        ),
        compiler_params=pltpu.CompilerParams(
            dimension_semantics=("parallel",),
            vmem_limit_bytes=64 * 1024 * 1024,
        ),
    )(x_nhwc, w1_k, w2_k)

    out_nhwc = out_flat.reshape(N, H, W, Cout)
    return jnp.transpose(out_nhwc, (0, 3, 1, 2))


def conv_block_reference(x, w1, w2):
    """Pure-JAX f32 reference matching the PyTorch forward (eval mode)."""
    def conv(h, w):
        return lax.conv_general_dilated(
            h, w, window_strides=(1, 1), padding=((1, 1), (1, 1)),
            dimension_numbers=("NCHW", "OIHW", "NCHW"))

    def in_lrelu(h):
        m = jnp.mean(h, axis=(2, 3), keepdims=True)
        v = jnp.mean((h - m) ** 2, axis=(2, 3), keepdims=True)
        y = (h - m) * lax.rsqrt(v + EPS)
        return jnp.where(y >= 0, y, NEG_SLOPE * y)

    h = in_lrelu(conv(x, w1))
    return in_lrelu(conv(h, w2))


if __name__ == "__main__":
    key = jax.random.PRNGKey(0)
    k_x, k_w1, k_w2 = jax.random.split(key, 3)

    N, Cin, Cout, H, W = 2, 4, 8, 16, 16
    dropout_probability = 0.0  # Dropout2d is identity in eval mode anyway

    x = jax.random.normal(k_x, (N, Cin, H, W), dtype=jnp.float32)
    # Deterministic parameter init (roughly kaiming-scale), NOT loaded from checkpoint.
    w1 = jax.random.normal(k_w1, (Cout, Cin, 3, 3), dtype=jnp.float32) * 0.1
    w2 = jax.random.normal(k_w2, (Cout, Cout, 3, 3), dtype=jnp.float32) * 0.1

    out = jax.block_until_ready(jax.jit(conv_block)(x, w1, w2))
    ref = jax.block_until_ready(conv_block_reference(x, w1, w2))

    assert out.shape == (N, Cout, H, W)
    # bf16 MXU operands with f32 accumulation vs. a pure-f32 reference.
    max_err = jnp.max(jnp.abs(out - ref))
    assert jnp.allclose(out, ref, atol=5e-2, rtol=5e-2), f"max abs err {max_err}"

    print("KERNEL_OK")
</pallas_src>

<mosaic_0001>
module attributes {stable_mosaic.version = 11 : i64} {
  func.func @conv_block_kernel(%arg0: i32, %arg1: memref<1x16x16x4xbf16, #tpu.memory_space<vmem>>, %arg2: memref<36x8xbf16, #tpu.memory_space<vmem>>, %arg3: memref<72x8xbf16, #tpu.memory_space<vmem>>, %arg4: memref<1x256x8xf32, #tpu.memory_space<vmem>>) attributes {dimension_semantics = [#tpu.dimension_semantics<parallel>], iteration_bounds = array<i64: 2>, scalar_prefetch = 0 : i64, scratch_operands = 0 : i64, tpu.core_type = #tpu.core_type<tc>, window_params = [{transform_indices = @transform_0, window_bounds = array<i64: 1, 16, 16, 4>}, {pipeline_mode = #tpu.pipeline_mode<synchronous>, transform_indices = @transform_1, window_bounds = array<i64: 36, 8>}, {pipeline_mode = #tpu.pipeline_mode<synchronous>, transform_indices = @transform_2, window_bounds = array<i64: 72, 8>}, {transform_indices = @transform_3, window_bounds = array<i64: 1, 256, 8>}]} {
    %c0 = arith.constant 0 : index
    %c0_0 = arith.constant 0 : index
    %c0_1 = arith.constant 0 : index
    %c0_2 = arith.constant 0 : index
    %0 = vector.load %arg1[%c0, %c0_0, %c0_1, %c0_2] : memref<1x16x16x4xbf16, #tpu.memory_space<vmem>>, vector<1x16x16x4xbf16>
    %cst = arith.constant 0.000000e+00 : bf16
    %1 = vector.broadcast %cst : bf16 to vector<1x1x16x4xbf16>
    %2 = tpu.concatenate %1, %0, %1 in 1 : vector<1x1x16x4xbf16>, vector<1x16x16x4xbf16>, vector<1x1x16x4xbf16> -> vector<1x18x16x4xbf16>
    %cst_3 = arith.constant 0.000000e+00 : bf16
    %3 = vector.broadcast %cst_3 : bf16 to vector<1x18x1x4xbf16>
    %4 = tpu.concatenate %3, %2, %3 in 2 : vector<1x18x1x4xbf16>, vector<1x18x16x4xbf16>, vector<1x18x1x4xbf16> -> vector<1x18x18x4xbf16>
    %5 = vector.extract_strided_slice %4 {offsets = [0, 0, 0, 0], sizes = [1, 16, 16, 4], strides = [1, 1, 1, 1]} : vector<1x18x18x4xbf16> to vector<1x16x16x4xbf16>
    %6 = vector.extract_strided_slice %4 {offsets = [0, 0, 1, 0], sizes = [1, 16, 16, 4], strides = [1, 1, 1, 1]} : vector<1x18x18x4xbf16> to vector<1x16x16x4xbf16>
    %7 = vector.extract_strided_slice %4 {offsets = [0, 0, 2, 0], sizes = [1, 16, 16, 4], strides = [1, 1, 1, 1]} : vector<1x18x18x4xbf16> to vector<1x16x16x4xbf16>
    %8 = vector.extract_strided_slice %4 {offsets = [0, 1, 0, 0], sizes = [1, 16, 16, 4], strides = [1, 1, 1, 1]} : vector<1x18x18x4xbf16> to vector<1x16x16x4xbf16>
    %9 = vector.extract_strided_slice %4 {offsets = [0, 1, 1, 0], sizes = [1, 16, 16, 4], strides = [1, 1, 1, 1]} : vector<1x18x18x4xbf16> to vector<1x16x16x4xbf16>
    %10 = vector.extract_strided_slice %4 {offsets = [0, 1, 2, 0], sizes = [1, 16, 16, 4], strides = [1, 1, 1, 1]} : vector<1x18x18x4xbf16> to vector<1x16x16x4xbf16>
    %11 = vector.extract_strided_slice %4 {offsets = [0, 2, 0, 0], sizes = [1, 16, 16, 4], strides = [1, 1, 1, 1]} : vector<1x18x18x4xbf16> to vector<1x16x16x4xbf16>
    %12 = vector.extract_strided_slice %4 {offsets = [0, 2, 1, 0], sizes = [1, 16, 16, 4], strides = [1, 1, 1, 1]} : vector<1x18x18x4xbf16> to vector<1x16x16x4xbf16>
    %13 = vector.extract_strided_slice %4 {offsets = [0, 2, 2, 0], sizes = [1, 16, 16, 4], strides = [1, 1, 1, 1]} : vector<1x18x18x4xbf16> to vector<1x16x16x4xbf16>
    %14 = tpu.concatenate %5, %6, %7, %8, %9, %10, %11, %12, %13 in 3 : vector<1x16x16x4xbf16>, vector<1x16x16x4xbf16>, vector<1x16x16x4xbf16>, vector<1x16x16x4xbf16>, vector<1x16x16x4xbf16>, vector<1x16x16x4xbf16>, vector<1x16x16x4xbf16>, vector<1x16x16x4xbf16>, vector<1x16x16x4xbf16> -> vector<1x16x16x36xbf16>
    %15 = vector.shape_cast %14 : vector<1x16x16x36xbf16> to vector<256x36xbf16>
    %c0_4 = arith.constant 0 : index
    %c0_5 = arith.constant 0 : index
    %16 = vector.load %arg2[%c0_4, %c0_5] : memref<36x8xbf16, #tpu.memory_space<vmem>>, vector<36x8xbf16>
    %cst_6 = arith.constant dense<0.000000e+00> : vector<256x8xf32>
    %17 = tpu.matmul %15, %16, %cst_6 {dimension_numbers = #tpu.dot_dimension_numbers<[1], [0], [0], [1], [0, 0, 1, 1], [], []>} : vector<256x36xbf16>, vector<36x8xbf16>, vector<256x8xf32> -> vector<256x8xf32>
    %18 = vector.shape_cast %17 : vector<256x8xf32> to vector<1x256x8xf32>
    %cst_7 = arith.constant dense<0.000000e+00> : vector<1x8xf32>
    %19 = vector.multi_reduction <add>, %18, %cst_7 [1] : vector<1x256x8xf32> to vector<1x8xf32>
    %20 = vector.shape_cast %19 : vector<1x8xf32> to vector<1x1x8xf32>
    %cst_8 = arith.constant 3.906250e-03 : f32
    %21 = vector.broadcast %cst_8 : f32 to vector<1x1x8xf32>
    %22 = arith.mulf %20, %21 : vector<1x1x8xf32>
    %23 = arith.mulf %18, %18 : vector<1x256x8xf32>
    %cst_9 = arith.constant dense<0.000000e+00> : vector<1x8xf32>
    %24 = vector.multi_reduction <add>, %23, %cst_9 [1] : vector<1x256x8xf32> to vector<1x8xf32>
    %25 = vector.shape_cast %24 : vector<1x8xf32> to vector<1x1x8xf32>
    %cst_10 = arith.constant 3.906250e-03 : f32
    %26 = vector.broadcast %cst_10 : f32 to vector<1x1x8xf32>
    %27 = arith.mulf %25, %26 : vector<1x1x8xf32>
    %28 = arith.mulf %22, %22 : vector<1x1x8xf32>
    %29 = arith.subf %27, %28 : vector<1x1x8xf32>
    %30 = vector.broadcast %22 : vector<1x1x8xf32> to vector<1x256x8xf32>
    %31 = arith.subf %18, %30 : vector<1x256x8xf32>
    %cst_11 = arith.constant 9.99999974E-6 : f32
    %32 = vector.broadcast %cst_11 : f32 to vector<1x1x8xf32>
    %33 = arith.addf %29, %32 : vector<1x1x8xf32>
    %34 = math.rsqrt %33 : vector<1x1x8xf32>
    %35 = vector.broadcast %34 : vector<1x1x8xf32> to vector<1x256x8xf32>
    %36 = arith.mulf %31, %35 : vector<1x256x8xf32>
    %cst_12 = arith.constant 0.000000e+00 : f32
    %37 = vector.broadcast %cst_12 : f32 to vector<1x256x8xf32>
    %38 = arith.cmpf oge, %36, %37 : vector<1x256x8xf32>
    %cst_13 = arith.constant 2.000000e-01 : f32
    %39 = vector.broadcast %cst_13 : f32 to vector<1x256x8xf32>
    %40 = arith.mulf %39, %36 : vector<1x256x8xf32>
    %41 = arith.select %38, %36, %40 : vector<1x256x8xi1>, vector<1x256x8xf32>
    %42 = vector.shape_cast %41 : vector<1x256x8xf32> to vector<1x16x16x8xf32>
    %43 = arith.truncf %42 : vector<1x16x16x8xf32> to vector<1x16x16x8xbf16>
    %cst_14 = arith.constant 0.000000e+00 : bf16
    %44 = vector.broadcast %cst_14 : bf16 to vector<1x1x16x8xbf16>
    %45 = tpu.concatenate %44, %43, %44 in 1 : vector<1x1x16x8xbf16>, vector<1x16x16x8xbf16>, vector<1x1x16x8xbf16> -> vector<1x18x16x8xbf16>
    %cst_15 = arith.constant 0.000000e+00 : bf16
    %46 = vector.broadcast %cst_15 : bf16 to vector<1x18x1x8xbf16>
    %47 = tpu.concatenate %46, %45, %46 in 2 : vector<1x18x1x8xbf16>, vector<1x18x16x8xbf16>, vector<1x18x1x8xbf16> -> vector<1x18x18x8xbf16>
    %48 = vector.extract_strided_slice %47 {offsets = [0, 0, 0, 0], sizes = [1, 16, 16, 8], strides = [1, 1, 1, 1]} : vector<1x18x18x8xbf16> to vector<1x16x16x8xbf16>
    %49 = vector.extract_strided_slice %47 {offsets = [0, 0, 1, 0], sizes = [1, 16, 16, 8], strides = [1, 1, 1, 1]} : vector<1x18x18x8xbf16> to vector<1x16x16x8xbf16>
    %50 = vector.extract_strided_slice %47 {offsets = [0, 0, 2, 0], sizes = [1, 16, 16, 8], strides = [1, 1, 1, 1]} : vector<1x18x18x8xbf16> to vector<1x16x16x8xbf16>
    %51 = vector.extract_strided_slice %47 {offsets = [0, 1, 0, 0], sizes = [1, 16, 16, 8], strides = [1, 1, 1, 1]} : vector<1x18x18x8xbf16> to vector<1x16x16x8xbf16>
    %52 = vector.extract_strided_slice %47 {offsets = [0, 1, 1, 0], sizes = [1, 16, 16, 8], strides = [1, 1, 1, 1]} : vector<1x18x18x8xbf16> to vector<1x16x16x8xbf16>
    %53 = vector.extract_strided_slice %47 {offsets = [0, 1, 2, 0], sizes = [1, 16, 16, 8], strides = [1, 1, 1, 1]} : vector<1x18x18x8xbf16> to vector<1x16x16x8xbf16>
    %54 = vector.extract_strided_slice %47 {offsets = [0, 2, 0, 0], sizes = [1, 16, 16, 8], strides = [1, 1, 1, 1]} : vector<1x18x18x8xbf16> to vector<1x16x16x8xbf16>
    %55 = vector.extract_strided_slice %47 {offsets = [0, 2, 1, 0], sizes = [1, 16, 16, 8], strides = [1, 1, 1, 1]} : vector<1x18x18x8xbf16> to vector<1x16x16x8xbf16>
    %56 = vector.extract_strided_slice %47 {offsets = [0, 2, 2, 0], sizes = [1, 16, 16, 8], strides = [1, 1, 1, 1]} : vector<1x18x18x8xbf16> to vector<1x16x16x8xbf16>
    %57 = tpu.concatenate %48, %49, %50, %51, %52, %53, %54, %55, %56 in 3 : vector<1x16x16x8xbf16>, vector<1x16x16x8xbf16>, vector<1x16x16x8xbf16>, vector<1x16x16x8xbf16>, vector<1x16x16x8xbf16>, vector<1x16x16x8xbf16>, vector<1x16x16x8xbf16>, vector<1x16x16x8xbf16>, vector<1x16x16x8xbf16> -> vector<1x16x16x72xbf16>
    %58 = vector.shape_cast %57 : vector<1x16x16x72xbf16> to vector<256x72xbf16>
    %c0_16 = arith.constant 0 : index
    %c0_17 = arith.constant 0 : index
    %59 = vector.load %arg3[%c0_16, %c0_17] : memref<72x8xbf16, #tpu.memory_space<vmem>>, vector<72x8xbf16>
    %cst_18 = arith.constant dense<0.000000e+00> : vector<256x8xf32>
    %60 = tpu.matmul %58, %59, %cst_18 {dimension_numbers = #tpu.dot_dimension_numbers<[1], [0], [0], [1], [0, 0, 1, 1], [], []>} : vector<256x72xbf16>, vector<72x8xbf16>, vector<256x8xf32> -> vector<256x8xf32>
    %61 = vector.shape_cast %60 : vector<256x8xf32> to vector<1x256x8xf32>
    %cst_19 = arith.constant dense<0.000000e+00> : vector<1x8xf32>
    %62 = vector.multi_reduction <add>, %61, %cst_19 [1] : vector<1x256x8xf32> to vector<1x8xf32>
    %63 = vector.shape_cast %62 : vector<1x8xf32> to vector<1x1x8xf32>
    %cst_20 = arith.constant 3.906250e-03 : f32
    %64 = vector.broadcast %cst_20 : f32 to vector<1x1x8xf32>
    %65 = arith.mulf %63, %64 : vector<1x1x8xf32>
    %66 = arith.mulf %61, %61 : vector<1x256x8xf32>
    %cst_21 = arith.constant dense<0.000000e+00> : vector<1x8xf32>
    %67 = vector.multi_reduction <add>, %66, %cst_21 [1] : vector<1x256x8xf32> to vector<1x8xf32>
    %68 = vector.shape_cast %67 : vector<1x8xf32> to vector<1x1x8xf32>
    %cst_22 = arith.constant 3.906250e-03 : f32
    %69 = vector.broadcast %cst_22 : f32 to vector<1x1x8xf32>
    %70 = arith.mulf %68, %69 : vector<1x1x8xf32>
    %71 = arith.mulf %65, %65 : vector<1x1x8xf32>
    %72 = arith.subf %70, %71 : vector<1x1x8xf32>
    %73 = vector.broadcast %65 : vector<1x1x8xf32> to vector<1x256x8xf32>
    %74 = arith.subf %61, %73 : vector<1x256x8xf32>
    %cst_23 = arith.constant 9.99999974E-6 : f32
    %75 = vector.broadcast %cst_23 : f32 to vector<1x1x8xf32>
    %76 = arith.addf %72, %75 : vector<1x1x8xf32>
    %77 = math.rsqrt %76 : vector<1x1x8xf32>
    %78 = vector.broadcast %77 : vector<1x1x8xf32> to vector<1x256x8xf32>
    %79 = arith.mulf %74, %78 : vector<1x256x8xf32>
    %cst_24 = arith.constant 0.000000e+00 : f32
    %80 = vector.broadcast %cst_24 : f32 to vector<1x256x8xf32>
    %81 = arith.cmpf oge, %79, %80 : vector<1x256x8xf32>
    %cst_25 = arith.constant 2.000000e-01 : f32
    %82 = vector.broadcast %cst_25 : f32 to vector<1x256x8xf32>
    %83 = arith.mulf %82, %79 : vector<1x256x8xf32>
    %84 = arith.select %81, %79, %83 : vector<1x256x8xi1>, vector<1x256x8xf32>
    %c0_26 = arith.constant 0 : index
    %c0_27 = arith.constant 0 : index
    %c0_28 = arith.constant 0 : index
    %85 = vector.load %arg4[%c0_26, %c0_27, %c0_28] : memref<1x256x8xf32, #tpu.memory_space<vmem>>, vector<1x256x8xf32>
    tpu.vector_store %arg4[%c0_26, %c0_27, %c0_28], %84 {strides = array<i32>} : memref<1x256x8xf32, #tpu.memory_space<vmem>>, vector<1x256x8xf32>,
    return
  }
  func.func @transform_0(%arg0: i32) -> (i32, i32, i32, i32) {
    %c0_i32 = arith.constant 0 : i32
    %c0_i32_0 = arith.constant 0 : i32
    %c0_i32_1 = arith.constant 0 : i32
    %c0_i32_2 = arith.constant 0 : i32
    return %arg0, %c0_i32, %c0_i32_0, %c0_i32_1 : i32, i32, i32, i32
  }
  func.func @transform_1(%arg0: i32) -> (i32, i32) {
    %c0_i32 = arith.constant 0 : i32
    %c0_i32_0 = arith.constant 0 : i32
    %c0_i32_1 = arith.constant 0 : i32
    return %c0_i32, %c0_i32_0 : i32, i32
  }
  func.func @transform_2(%arg0: i32) -> (i32, i32) {
    %c0_i32 = arith.constant 0 : i32
    %c0_i32_0 = arith.constant 0 : i32
    %c0_i32_1 = arith.constant 0 : i32
    return %c0_i32, %c0_i32_0 : i32, i32
  }
  func.func @transform_3(%arg0: i32) -> (i32, i32, i32) {
    %c0_i32 = arith.constant 0 : i32
    %c0_i32_0 = arith.constant 0 : i32
    %c0_i32_1 = arith.constant 0 : i32
    return %arg0, %c0_i32, %c0_i32_0 : i32, i32, i32
  }
}

</mosaic_0001>

<llo_original>
// kernel: conv_block.1
$region0: #{conv_block.1}
  #allocation0 [shape = 'u32[]', space=smem, size = 0x4, offset = 0x4, fixed_abs, tag = 'smem constant byte address 0x4 - core index']
  #allocation1 [shape = 'u32[72,128]{1,0:T(1,128)}', space=vmem, size = 0x9000, scoped, tag = 'internal scratch']
  %s0 = inlined_call_operand.vmem [shape: bf16[2,16,16,4], index: 0, kind: input, shape index: {}]
  %s1 = inlined_call_operand.vmem [shape: bf16[36,8], index: 1, kind: input, shape index: {}]
  %s2 = inlined_call_operand.vmem [shape: bf16[72,8], index: 2, kind: input, shape index: {}]
  %s3 = inlined_call_operand.vmem [shape: f32[2,256,8], index: 3, kind: output, shape index: {}]
  %s4 = sld [smem:[#allocation0]]
  $region45: #{conv_block.1} parent=0
    _
  %s6 = ssub.s32 1, %s4
  %s7 = scalar_select 0, %s6, %s4
  loop: start=0, step=1, limit=4
  $region2: #{conv_block.1} parent=0 // loop_pre_header
    _
  $region3: #{conv_block.1} parent=0 // loop_header
    %s9 = sphi 0, %s13
    %p10 = scmp.ge.s32.totalorder %s9, 4
    %s19 = sphi 0, %s21
    %s22 = sphi 0, %s19
    %s23 = sphi 0, %s22
    %s39 = sphi 0, %s23
    %s43 = sphi 0, %s43
    %s45 = sphi 0, %s43
    %s46 = sphi 0, %s45
    %s60 = sphi 0, %s46
    %s64 = sphi 0, %s64
    %s66 = sphi 0, %s64
    %s67 = sphi 0, %s66
    %s81 = sphi 0, %s67
    %s87 = sphi 0, %s89
    %s90 = sphi 0, %s87
    %s91 = sphi 0, %s90
    %s107 = sphi 0, %s91
  $region4: #{conv_block.1} parent=0 // loop_header_branch
    %12 = sbr.rel (%p10) target = $region8
  $region5: #{conv_block.1} parent=0 // loop_body
    %s14 = ssub.s32 %s9, 1
    %s15 = ssub.s32 %s9, 2
    %s16 = sadd.s32 %s9, 1
    %s17 = ssub.s32 %s9, %s16
    %p18 = scmp.eq.s32.totalorder %s17, 0
    %s20 = sadd.s32 %s19, 1
    %s21 = scalar_select %p18, %s19, %s20
    %p24 = pneg %p18
    %p25 = scmp.eq.s32.totalorder %s9, 1
    %p26 = por %p24, %p25
    %p27 = scmp.ne.s32.totalorder %s19, %s22
    %p28 = scmp.eq.s32.totalorder %s9, 0
    %p29 = por %p27, %p28
    %p30 = scmp.ne.s32.totalorder %s19, %s22
    %p31 = scmp.eq.s32.totalorder %s14, 1
    %p32 = por %p30, %p31
    %p33 = scmp.ne.s32.totalorder %s22, %s23
    %p34 = scmp.eq.s32.totalorder %s14, 0
    %p35 = por %p33, %p34
    %p36 = scmp.ne.s32.totalorder %s22, %s23
    %p37 = scmp.eq.s32.totalorder %s15, 1
    %p38 = por %p36, %p37
    %p40 = scmp.ne.s32.totalorder %s23, %s39
    %p41 = scmp.eq.s32.totalorder %s15, 0
    %p42 = por %p40, %p41
    %s44 = sadd.s32 %s43, 1
    %p47 = scmp.eq.s32.totalorder %s9, 1
    %p48 = scmp.ne.s32.totalorder %s43, %s45
    %p49 = scmp.eq.s32.totalorder %s9, 0
    %p50 = por %p48, %p49
    %p51 = scmp.ne.s32.totalorder %s43, %s45
    %p52 = scmp.eq.s32.totalorder %s14, 1
    %p53 = por %p51, %p52
    %p54 = scmp.ne.s32.totalorder %s45, %s46
    %p55 = scmp.eq.s32.totalorder %s14, 0
    %p56 = por %p54, %p55
    %p57 = scmp.ne.s32.totalorder %s45, %s46
    %p58 = scmp.eq.s32.totalorder %s15, 1
    %p59 = por %p57, %p58
    %p61 = scmp.ne.s32.totalorder %s46, %s60
    %p62 = scmp.eq.s32.totalorder %s15, 0
    %p63 = por %p61, %p62
    %s65 = sadd.s32 %s64, 1
    %p68 = scmp.eq.s32.totalorder %s9, 1
    %p69 = scmp.ne.s32.totalorder %s64, %s66
    %p70 = scmp.eq.s32.totalorder %s9, 0
    %p71 = por %p69, %p70
    %p72 = scmp.ne.s32.totalorder %s64, %s66
    %p73 = scmp.eq.s32.totalorder %s14, 1
    %p74 = por %p72, %p73
    %p75 = scmp.ne.s32.totalorder %s66, %s67
    %p76 = scmp.eq.s32.totalorder %s14, 0
    %p77 = por %p75, %p76
    %p78 = scmp.ne.s32.totalorder %s66, %s67
    %p79 = scmp.eq.s32.totalorder %s15, 1
    %p80 = por %p78, %p79
    %p82 = scmp.ne.s32.totalorder %s67, %s81
    %p83 = scmp.eq.s32.totalorder %s15, 0
    %p84 = por %p82, %p83
    %s85 = ssub.s32 %s9, %s16
    %p86 = scmp.eq.s32.totalorder %s85, 0
    %s88 = sadd.s32 %s87, 1
    %s89 = scalar_select %p86, %s87, %s88
    %p92 = pneg %p86
    %p93 = scmp.eq.s32.totalorder %s9, 1
    %p94 = por %p92, %p93
    %p95 = scmp.ne.s32.totalorder %s87, %s90
    %p96 = scmp.eq.s32.totalorder %s9, 0
    %p97 = por %p95, %p96
    %p98 = scmp.ne.s32.totalorder %s87, %s90
    %p99 = scmp.eq.s32.totalorder %s14, 1
    %p100 = por %p98, %p99
    %p101 = scmp.ne.s32.totalorder %s90, %s91
    %p102 = scmp.eq.s32.totalorder %s14, 0
    %p103 = por %p101, %p102
    %p104 = scmp.ne.s32.totalorder %s90, %s91
    %p105 = scmp.eq.s32.totalorder %s15, 1
    %p106 = por %p104, %p105
    %p108 = scmp.ne.s32.totalorder %s91, %s107
    %p109 = scmp.eq.s32.totalorder %s15, 0
    %p110 = por %p108, %p109
    %p111 = scmp.le.s32.totalorder 1, %s9
    %p112 = scmp.lt.s32.totalorder %s9, 3
    %p113 = pnand %p111, %p112
    %p114 = pneg %p113
    // Predicated region
    $region9: #{conv_block.1} parent=5 // pred_check
      _
    $region10: #{conv_block.1} parent=5 // pred_check_branch
      %116 = sbr.rel (%p113) target = $region12
    $region11: #{conv_block.1} parent=5 // pred_region
      %s117 = ssub.s32 %s9, 1
      // Predicated region
      $region13: #{conv_block.1} parent=11 // pred_check
        %p118 = pneg %p56
      $region14: #{conv_block.1} parent=11 // pred_check_branch
        %120 = sbr.rel (%p118) target = $region16
      $region15: #{conv_block.1} parent=11 // pred_region
        _
      $region16: #{conv_block.1} parent=11 // pred_fallthru
        _
      // Predicated region
      $region17: #{conv_block.1} parent=11 // pred_check
        %p121 = pneg %p77
      $region18: #{conv_block.1} parent=11 // pred_check_branch
        %123 = sbr.rel (%p121) target = $region20
      $region19: #{conv_block.1} parent=11 // pred_region
        _
      $region20: #{conv_block.1} parent=11 // pred_fallthru
        _
    $region12: #{conv_block.1} parent=5 // pred_fallthru
      _
    %p124 = scmp.lt.s32.totalorder %s9, 2
    // Predicated region
    $region21: #{conv_block.1} parent=5 // pred_check
      %p125 = pneg %p124
    $region22: #{conv_block.1} parent=5 // pred_check_branch
      %127 = sbr.rel (%p125) target = $region24
    $region23: #{conv_block.1} parent=5 // pred_region
      // Predicated region
      $region25: #{conv_block.1} parent=23 // pred_check
        %p128 = pneg %p29
      $region26: #{conv_block.1} parent=23 // pred_check_branch
        %130 = sbr.rel (%p128) target = $region28
      $region27: #{conv_block.1} parent=23 // pred_region
        %p131 = scmp.lt.s32.totalorder %s9, 1
        %s132 = scalar_select %p131, %s9, 1
        %s133 = smul.addr %s132, 32
        %s134 = smul.addr %s133, 4
        %s135 = scalar_lea.vmem %s0, %s134
      $region28: #{conv_block.1} parent=23 // pred_fallthru
        _
    $region24: #{conv_block.1} parent=5 // pred_fallthru
      _
    %p136 = scmp.le.s32.totalorder 1, %s9
    %p137 = scmp.lt.s32.totalorder %s9, 3
    %p138 = pnand %p136, %p137
    %p139 = pneg %p138
    // Predicated region
    $region29: #{conv_block.1} parent=5 // pred_check
      _
    $region30: #{conv_block.1} parent=5 // pred_check_branch
      %141 = sbr.rel (%p138) target = $region32
    $region31: #{conv_block.1} parent=5 // pred_region
      %s142 = ssub.s32 %s9, 1
      %p143 = scmp.lt.s32.totalorder %s14, 1
      %s144 = scalar_select %p143, %s14, 1
      %s145 = smul.addr %s144, 32
      %s146 = smul.addr %s145, 4
      %s147 = scalar_lea.vmem %s0, %s146
      %p148 = pneg %p35
      %p149 = pneg %p32
      %p150 = pneg %p56
      %p151 = pneg %p53
      %p152 = pneg %p77
      %p153 = pneg %p74
      %p154 = pneg %p103
      %p155 = pneg %p100
      %p156 = scmp.lt.s32.totalorder %s14, 1
      %s157 = scalar_select %p156, %s14, 1
      %s158 = smul.addr %s157, 32
      %s159 = smul.addr %s158, 8
      %s160 = scalar_lea.vmem %s3, %s159
      %p161 = scmp.lt.s32.totalorder %s14, 1
      %s162 = scalar_select %p161, %s14, 1
      %s163 = smul.addr %s162, 32
      %s164 = smul.addr %s163, 4
      %s165 = scalar_lea.vmem %s0, %s164
      %p166 = scmp.lt.s32.totalorder %s14, 1
      %s167 = scalar_select %p166, %s14, 1
      %s168 = smul.addr %s167, 32
      %s169 = smul.addr %s168, 8
      %s170 = scalar_lea.vmem %s3, %s169
      %v172 = vld [vmem:[%s165] sm:$0xf]
      %v173 = vld [vmem:[%s165 + $0x4] sm:$0xf]
      %v174 = vld [vmem:[%s165 + $0x8] sm:$0xf]
      %v175 = vld [vmem:[%s165 + $0xc] sm:$0xf]
      %v176 = vld [vmem:[%s165 + $0x10] sm:$0xf]
      %v177 = vld [vmem:[%s165 + $0x14] sm:$0xf]
      %v178 = vld [vmem:[%s165 + $0x18] sm:$0xf]
      %v179 = vld [vmem:[%s165 + $0x1c] sm:$0xf]
      %v180 = vld [vmem:[%s165 + $0x20] sm:$0xf]
      %v181 = vld [vmem:[%s165 + $0x24] sm:$0xf]
      %v182 = vld [vmem:[%s165 + $0x28] sm:$0xf]
      %v183 = vld [vmem:[%s165 + $0x2c] sm:$0xf]
      %v184 = vld [vmem:[%s165 + $0x30] sm:$0xf]
      %v185 = vld [vmem:[%s165 + $0x34] sm:$0xf]
      %v186 = vld [vmem:[%s165 + $0x38] sm:$0xf]
      %v187 = vld [vmem:[%s165 + $0x3c] sm:$0xf]
      %v188 = vld [vmem:[%s165 + $0x40] sm:$0xf]
      %v189 = vld [vmem:[%s165 + $0x44] sm:$0xf]
      %v190 = vld [vmem:[%s165 + $0x48] sm:$0xf]
      %v191 = vld [vmem:[%s165 + $0x4c] sm:$0xf]
      %v192 = vld [vmem:[%s165 + $0x50] sm:$0xf]
      %v193 = vld [vmem:[%s165 + $0x54] sm:$0xf]
      %v194 = vld [vmem:[%s165 + $0x58] sm:$0xf]
      %v195 = vld [vmem:[%s165 + $0x5c] sm:$0xf]
      %v196 = vld [vmem:[%s165 + $0x60] sm:$0xf]
      %v197 = vld [vmem:[%s165 + $0x64] sm:$0xf]
      %v198 = vld [vmem:[%s165 + $0x68] sm:$0xf]
      %v199 = vld [vmem:[%s165 + $0x6c] sm:$0xf]
      %v200 = vld [vmem:[%s165 + $0x70] sm:$0xf]
      %v201 = vld [vmem:[%s165 + $0x74] sm:$0xf]
      %v202 = vld [vmem:[%s165 + $0x78] sm:$0xf]
      %v203 = vld [vmem:[%s165 + $0x7c] sm:$0xf]
      %v236 = vunpack.c.l.b16 %v172
      %v237 = vunpack.c.l.b16 %v173
      %v238 = vunpack.c.l.b16 %v174
      %v239 = vunpack.c.l.b16 %v175
      %v240 = vunpack.c.l.b16 %v176
      %v241 = vunpack.c.l.b16 %v177
      %v242 = vunpack.c.l.b16 %v178
      %v243 = vunpack.c.l.b16 %v179
      %v244 = vunpack.c.l.b16 %v180
      %v245 = vunpack.c.l.b16 %v181
      %v246 = vunpack.c.l.b16 %v182
      %v247 = vunpack.c.l.b16 %v183
      %v248 = vunpack.c.l.b16 %v184
      %v249 = vunpack.c.l.b16 %v185
      %v250 = vunpack.c.l.b16 %v186
      %v251 = vunpack.c.l.b16 %v187
      %v252 = vunpack.c.l.b16 %v188
      %v253 = vunpack.c.l.b16 %v189
      %v254 = vunpack.c.l.b16 %v190
      %v255 = vunpack.c.l.b16 %v191
      %v256 = vunpack.c.l.b16 %v192
      %v257 = vunpack.c.l.b16 %v193
      %v258 = vunpack.c.l.b16 %v194
      %v259 = vunpack.c.l.b16 %v195
      %v260 = vunpack.c.l.b16 %v196
      %v261 = vunpack.c.l.b16 %v197
      %v262 = vunpack.c.l.b16 %v198
      %v263 = vunpack.c.l.b16 %v199
      %v264 = vunpack.c.l.b16 %v200
      %v265 = vunpack.c.l.b16 %v201
      %v266 = vunpack.c.l.b16 %v202
      %v267 = vunpack.c.l.b16 %v203
      %v268 = vpack.c.b16 %v237, %v236
      %v269 = vpack.c.b16 %v239, %v238
      %v270 = vpack.c.b16 %v241, %v240
      %v271 = vpack.c.b16 %v243, %v242
      %v272 = vpack.c.b16 %v245, %v244
      %v273 = vpack.c.b16 %v247, %v246
      %v274 = vpack.c.b16 %v249, %v248
      %v275 = vpack.c.b16 %v251, %v250
      %v276 = vpack.c.b16 %v253, %v252
      %v277 = vpack.c.b16 %v255, %v254
      %v278 = vpack.c.b16 %v257, %v256
      %v279 = vpack.c.b16 %v259, %v258
      %v280 = vpack.c.b16 %v261, %v260
      %v281 = vpack.c.b16 %v263, %v262
      %v282 = vpack.c.b16 %v265, %v264
      %v283 = vpack.c.b16 %v267, %v266
      %v285 = vshrl.u32 0, 16
      %v287 = vrot.slane %v285, 7
      %v288 = vshll.u32 0, 16
      %v290 = vor.u32 %v287, %v288
      %v292 = vshrl.u32 %v268, 16
      %v294 = vrot.slane %v292, 7
      %v295 = vshll.u32 %v268, 16
      %v297 = vor.u32 %v294, %v295
      %v299 = vshrl.u32 %v269, 16
      %v301 = vrot.slane %v299, 7
      %v302 = vshll.u32 %v269, 16
      %v304 = vor.u32 %v301, %v302
      %v306 = vshrl.u32 %v270, 16
      %v308 = vrot.slane %v306, 7
      %v309 = vshll.u32 %v270, 16
      %v311 = vor.u32 %v308, %v309
      %v313 = vshrl.u32 %v271, 16
      %v315 = vrot.slane %v313, 7
      %v316 = vshll.u32 %v271, 16
      %v318 = vor.u32 %v315, %v316
      %v320 = vshrl.u32 %v272, 16
      %v322 = vrot.slane %v320, 7
      %v323 = vshll.u32 %v272, 16
      %v325 = vor.u32 %v322, %v323
      %v327 = vshrl.u32 %v273, 16
      %v329 = vrot.slane %v327, 7
      %v330 = vshll.u32 %v273, 16
      %v332 = vor.u32 %v329, %v330
      %v334 = vshrl.u32 %v274, 16
      %v336 = vrot.slane %v334, 7
      %v337 = vshll.u32 %v274, 16
      %v339 = vor.u32 %v336, %v337
      %v341 = vshrl.u32 %v275, 16
      %v343 = vrot.slane %v341, 7
      %v344 = vshll.u32 %v275, 16
      %v346 = vor.u32 %v343, %v344
      %v348 = vshrl.u32 %v276, 16
      %v350 = vrot.slane %v348, 7
      %v351 = vshll.u32 %v276, 16
      %v353 = vor.u32 %v350, %v351
      %v355 = vshrl.u32 %v277, 16
      %v357 = vrot.slane %v355, 7
      %v358 = vshll.u32 %v277, 16
      %v360 = vor.u32 %v357, %v358
      %v362 = vshrl.u32 %v278, 16
      %v364 = vrot.slane %v362, 7
      %v365 = vshll.u32 %v278, 16
      %v367 = vor.u32 %v364, %v365
      %v369 = vshrl.u32 %v279, 16
      %v371 = vrot.slane %v369, 7
      %v372 = vshll.u32 %v279, 16
      %v374 = vor.u32 %v371, %v372
      %v376 = vshrl.u32 %v280, 16
      %v378 = vrot.slane %v376, 7
      %v379 = vshll.u32 %v280, 16
      %v381 = vor.u32 %v378, %v379
      %v383 = vshrl.u32 %v281, 16
      %v385 = vrot.slane %v383, 7
      %v386 = vshll.u32 %v281, 16
      %v388 = vor.u32 %v385, %v386
      %v390 = vshrl.u32 %v282, 16
      %v392 = vrot.slane %v390, 7
      %v393 = vshll.u32 %v282, 16
      %v395 = vor.u32 %v392, %v393
      %v397 = vshrl.u32 %v283, 16
      %v399 = vrot.slane %v397, 7
      %v400 = vshll.u32 %v283, 16
      %v402 = vor.u32 %v399, %v400
      %vm437 = vcmask 1040384
      %vm438 = vsmask.f32 256
      %vm439 = vmand %vm437, %vm438
      %v440 = vsel %vm439, 0, %v290
      %v441 = vsel %vm439, 0, %v297
      %v442 = vsel %vm439, 0, %v304
      %v443 = vsel %vm439, 0, %v311
      %v444 = vsel %vm439, 0, %v318
      %v445 = vsel %vm439, 0, %v325
      %v446 = vsel %vm439, 0, %v332
      %v447 = vsel %vm439, 0, %v339
      %v448 = vsel %vm439, 0, %v346
      %v449 = vsel %vm439, 0, %v353
      %v450 = vsel %vm439, 0, %v360
      %v451 = vsel %vm439, 0, %v367
      %v452 = vsel %vm439, 0, %v374
      %v453 = vsel %vm439, 0, %v381
      %v454 = vsel %vm439, 0, %v388
      %v455 = vsel %vm439, 0, %v395
      %v456 = vsel %vm439, 0, %v402
      %v457 = vsel %vm439, %v287, 0
      %v458 = vsel %vm439, %v294, 0
      %v459 = vsel %vm439, %v301, 0
      %v460 = vsel %vm439, %v308, 0
      %v461 = vsel %vm439, %v315, 0
      %v462 = vsel %vm439, %v322, 0
      %v463 = vsel %vm439, %v329, 0
      %v464 = vsel %vm439, %v336, 0
      %v465 = vsel %vm439, %v343, 0
      %v466 = vsel %vm439, %v350, 0
      %v467 = vsel %vm439, %v357, 0
      %v468 = vsel %vm439, %v364, 0
      %v469 = vsel %vm439, %v371, 0
      %v470 = vsel %vm439, %v378, 0
      %v471 = vsel %vm439, %v385, 0
      %v472 = vsel %vm439, %v392, 0
      %v473 = vsel %vm439, %v399, 0
      %vm474 = vsmask.f32 7424
      %v476 = vshrl.u32 %v440, 16
      %v478 = vshll.u32 %v440, 16
      %v480 = vrot.slane %v478, 1
      %v481 = vor.u32 %v476, %v480
      %v483 = vshll.u32 %v457, 16
      %v485 = vrot.slane %v483, 1
      %v486 = vsel %vm474, %v481, %v485
      %v488 = vshrl.u32 %v441, 16
      %v490 = vshll.u32 %v441, 16
      %v492 = vrot.slane %v490, 1
      %v493 = vor.u32 %v488, %v492
      %v495 = vshll.u32 %v458, 16
      %v497 = vrot.slane %v495, 1
      %v498 = vsel %vm474, %v493, %v497
      %v500 = vshrl.u32 %v442, 16
      %v502 = vshll.u32 %v442, 16
      %v504 = vrot.slane %v502, 1
      %v505 = vor.u32 %v500, %v504
      %v507 = vshll.u32 %v459, 16
      %v509 = vrot.slane %v507, 1
      %v510 = vsel %vm474, %v505, %v509
      %v512 = vshrl.u32 %v443, 16
      %v514 = vshll.u32 %v443, 16
      %v516 = vrot.slane %v514, 1
      %v517 = vor.u32 %v512, %v516
      %v519 = vshll.u32 %v460, 16
      %v521 = vrot.slane %v519, 1
      %v522 = vsel %vm474, %v517, %v521
      %v524 = vshrl.u32 %v444, 16
      %v526 = vshll.u32 %v444, 16
      %v528 = vrot.slane %v526, 1
      %v529 = vor.u32 %v524, %v528
      %v531 = vshll.u32 %v461, 16
      %v533 = vrot.slane %v531, 1
      %v534 = vsel %vm474, %v529, %v533
      %v536 = vshrl.u32 %v445, 16
      %v538 = vshll.u32 %v445, 16
      %v540 = vrot.slane %v538, 1
      %v541 = vor.u32 %v536, %v540
      %v543 = vshll.u32 %v462, 16
      %v545 = vrot.slane %v543, 1
      %v546 = vsel %vm474, %v541, %v545
      %v548 = vshrl.u32 %v446, 16
      %v550 = vshll.u32 %v446, 16
      %v552 = vrot.slane %v550, 1
      %v553 = vor.u32 %v548, %v552
      %v555 = vshll.u32 %v463, 16
      %v557 = vrot.slane %v555, 1
      %v558 = vsel %vm474, %v553, %v557
      %v560 = vshrl.u32 %v447, 16
      %v562 = vshll.u32 %v447, 16
      %v564 = vrot.slane %v562, 1
      %v565 = vor.u32 %v560, %v564
      %v567 = vshll.u32 %v464, 16
      %v569 = vrot.slane %v567, 1
      %v570 = vsel %vm474, %v565, %v569
      %v572 = vshrl.u32 %v448, 16
      %v574 = vshll.u32 %v448, 16
      %v576 = vrot.slane %v574, 1
      %v577 = vor.u32 %v572, %v576
      %v579 = vshll.u32 %v465, 16
      %v581 = vrot.slane %v579, 1
      %v582 = vsel %vm474, %v577, %v581
      %v584 = vshrl.u32 %v449, 16
      %v586 = vshll.u32 %v449, 16
      %v588 = vrot.slane %v586, 1
      %v589 = vor.u32 %v584, %v588
      %v591 = vshll.u32 %v466, 16
      %v593 = vrot.slane %v591, 1
      %v594 = vsel %vm474, %v589, %v593
      %v596 = vshrl.u32 %v450, 16
      %v598 = vshll.u32 %v450, 16
      %v600 = vrot.slane %v598, 1
      %v601 = vor.u32 %v596, %v600
      %v603 = vshll.u32 %v467, 16
      %v605 = vrot.slane %v603, 1
      %v606 = vsel %vm474, %v601, %v605
      %v608 = vshrl.u32 %v451, 16
      %v610 = vshll.u32 %v451, 16
      %v612 = vrot.slane %v610, 1
      %v613 = vor.u32 %v608, %v612
      %v615 = vshll.u32 %v468, 16
      %v617 = vrot.slane %v615, 1
      %v618 = vsel %vm474, %v613, %v617
      %v620 = vshrl.u32 %v452, 16
      %v622 = vshll.u32 %v452, 16
      %v624 = vrot.slane %v622, 1
      %v625 = vor.u32 %v620, %v624
      %v627 = vshll.u32 %v469, 16
      %v629 = vrot.slane %v627, 1
      %v630 = vsel %vm474, %v625, %v629
      %v632 = vshrl.u32 %v453, 16
      %v634 = vshll.u32 %v453, 16
      %v636 = vrot.slane %v634, 1
      %v637 = vor.u32 %v632, %v636
      %v639 = vshll.u32 %v470, 16
      %v641 = vrot.slane %v639, 1
      %v642 = vsel %vm474, %v637, %v641
      %v644 = vshrl.u32 %v454, 16
      %v646 = vshll.u32 %v454, 16
      %v648 = vrot.slane %v646, 1
      %v649 = vor.u32 %v644, %v648
      %v651 = vshll.u32 %v471, 16
      %v653 = vrot.slane %v651, 1
      %v654 = vsel %vm474, %v649, %v653
      %v656 = vshrl.u32 %v455, 16
      %v658 = vshll.u32 %v455, 16
      %v660 = vrot.slane %v658, 1
      %v661 = vor.u32 %v656, %v660
      %v663 = vshll.u32 %v472, 16
      %v665 = vrot.slane %v663, 1
      %v666 = vsel %vm474, %v661, %v665
      %667 = vrot.lane.b32.xlu0 %v486, 4
      %v668 = vpop.permute.xlu0 %667
      %669 = vrot.lane.b32.xlu0 %v498, 4
      %v670 = vpop.permute.xlu0 %669
      %671 = vrot.lane.b32.xlu0 %v510, 4
      %v672 = vpop.permute.xlu0 %671
      %673 = vrot.lane.b32.xlu0 %v522, 4
      %v674 = vpop.permute.xlu0 %673
      %675 = vrot.lane.b32.xlu0 %v534, 4
      %v676 = vpop.permute.xlu0 %675
      %677 = vrot.lane.b32.xlu0 %v546, 4
      %v678 = vpop.permute.xlu0 %677
      %679 = vrot.lane.b32.xlu0 %v558, 4
      %v680 = vpop.permute.xlu0 %679
      %681 = vrot.lane.b32.xlu0 %v570, 4
      %v682 = vpop.permute.xlu0 %681
      %683 = vrot.lane.b32.xlu0 %v582, 4
      %v684 = vpop.permute.xlu0 %683
      %685 = vrot.lane.b32.xlu0 %v594, 4
      %v686 = vpop.permute.xlu0 %685
      %687 = vrot.lane.b32.xlu0 %v606, 4
      %v688 = vpop.permute.xlu0 %687
      %689 = vrot.lane.b32.xlu0 %v618, 4
      %v690 = vpop.permute.xlu0 %689
      %691 = vrot.lane.b32.xlu0 %v630, 4
      %v692 = vpop.permute.xlu0 %691
      %693 = vrot.lane.b32.xlu0 %v642, 4
      %v694 = vpop.permute.xlu0 %693
      %695 = vrot.lane.b32.xlu0 %v654, 4
      %v696 = vpop.permute.xlu0 %695
      %697 = vrot.lane.b32.xlu0 %v666, 4
      %v698 = vpop.permute.xlu0 %697
      %vm731 = vcmask 1046528
      %v732 = vrot.slane %v440, 1
      %v733 = vrot.slane %v457, 1
      %v734 = vsel %vm731, %v732, %v733
      %v735 = vrot.slane %v441, 1
      %v736 = vrot.slane %v458, 1
      %v737 = vsel %vm731, %v735, %v736
      %v738 = vrot.slane %v442, 1
      %v739 = vrot.slane %v459, 1
      %v740 = vsel %vm731, %v738, %v739
      %v741 = vrot.slane %v443, 1
      %v742 = vrot.slane %v460, 1
      %v743 = vsel %vm731, %v741, %v742
      %v744 = vrot.slane %v444, 1
      %v745 = vrot.slane %v461, 1
      %v746 = vsel %vm731, %v744, %v745
      %v747 = vrot.slane %v445, 1
      %v748 = vrot.slane %v462, 1
      %v749 = vsel %vm731, %v747, %v748
      %v750 = vrot.slane %v446, 1
      %v751 = vrot.slane %v463, 1
      %v752 = vsel %vm731, %v750, %v751
      %v753 = vrot.slane %v447, 1
      %v754 = vrot.slane %v464, 1
      %v755 = vsel %vm731, %v753, %v754
      %v756 = vrot.slane %v448, 1
      %v757 = vrot.slane %v465, 1
      %v758 = vsel %vm731, %v756, %v757
      %v759 = vrot.slane %v449, 1
      %v760 = vrot.slane %v466, 1
      %v761 = vsel %vm731, %v759, %v760
      %v762 = vrot.slane %v450, 1
      %v763 = vrot.slane %v467, 1
      %v764 = vsel %vm731, %v762, %v763
      %v765 = vrot.slane %v451, 1
      %v766 = vrot.slane %v468, 1
      %v767 = vsel %vm731, %v765, %v766
      %v768 = vrot.slane %v452, 1
      %v769 = vrot.slane %v469, 1
      %v770 = vsel %vm731, %v768, %v769
      %v771 = vrot.slane %v453, 1
      %v772 = vrot.slane %v470, 1
      %v773 = vsel %vm731, %v771, %v772
      %v774 = vrot.slane %v454, 1
      %v775 = vrot.slane %v471, 1
      %v776 = vsel %vm731, %v774, %v775
      %v777 = vrot.slane %v455, 1
      %v778 = vrot.slane %v472, 1
      %v779 = vsel %vm731, %v777, %v778
      %780 = vrot.lane.b32.xlu0 %v734, 8
      %v781 = vpop.permute.xlu0 %780
      %782 = vrot.lane.b32.xlu0 %v737, 8
      %v783 = vpop.permute.xlu0 %782
      %784 = vrot.lane.b32.xlu0 %v740, 8
      %v785 = vpop.permute.xlu0 %784
      %786 = vrot.lane.b32.xlu0 %v743, 8
      %v787 = vpop.permute.xlu0 %786
      %788 = vrot.lane.b32.xlu0 %v746, 8
      %v789 = vpop.permute.xlu0 %788
      %790 = vrot.lane.b32.xlu0 %v749, 8
      %v791 = vpop.permute.xlu0 %790
      %792 = vrot.lane.b32.xlu0 %v752, 8
      %v793 = vpop.permute.xlu0 %792
      %794 = vrot.lane.b32.xlu0 %v755, 8
      %v795 = vpop.permute.xlu0 %794
      %796 = vrot.lane.b32.xlu0 %v758, 8
      %v797 = vpop.permute.xlu0 %796
      %798 = vrot.lane.b32.xlu0 %v761, 8
      %v799 = vpop.permute.xlu0 %798
      %800 = vrot.lane.b32.xlu0 %v764, 8
      %v801 = vpop.permute.xlu0 %800
      %802 = vrot.lane.b32.xlu0 %v767, 8
      %v803 = vpop.permute.xlu0 %802
      %804 = vrot.lane.b32.xlu0 %v770, 8
      %v805 = vpop.permute.xlu0 %804
      %806 = vrot.lane.b32.xlu0 %v773, 8
      %v807 = vpop.permute.xlu0 %806
      %808 = vrot.lane.b32.xlu0 %v776, 8
      %v809 = vpop.permute.xlu0 %808
      %810 = vrot.lane.b32.xlu0 %v779, 8
      %v811 = vpop.permute.xlu0 %810
      %813 = vrot.lane.b32.xlu0 %v441, 12
      %v814 = vpop.permute.xlu0 %813
      %815 = vrot.lane.b32.xlu0 %v442, 12
      %v816 = vpop.permute.xlu0 %815
      %817 = vrot.lane.b32.xlu0 %v443, 12
      %v818 = vpop.permute.xlu0 %817
      %819 = vrot.lane.b32.xlu0 %v444, 12
      %v820 = vpop.permute.xlu0 %819
      %821 = vrot.lane.b32.xlu0 %v445, 12
      %v822 = vpop.permute.xlu0 %821
      %823 = vrot.lane.b32.xlu0 %v446, 12
      %v824 = vpop.permute.xlu0 %823
      %825 = vrot.lane.b32.xlu0 %v447, 12
      %v826 = vpop.permute.xlu0 %825
      %827 = vrot.lane.b32.xlu0 %v448, 12
      %v828 = vpop.permute.xlu0 %827
      %829 = vrot.lane.b32.xlu0 %v449, 12
      %v830 = vpop.permute.xlu0 %829
      %831 = vrot.lane.b32.xlu0 %v450, 12
      %v832 = vpop.permute.xlu0 %831
      %833 = vrot.lane.b32.xlu0 %v451, 12
      %v834 = vpop.permute.xlu0 %833
      %835 = vrot.lane.b32.xlu0 %v452, 12
      %v836 = vpop.permute.xlu0 %835
      %837 = vrot.lane.b32.xlu0 %v453, 12
      %v838 = vpop.permute.xlu0 %837
      %839 = vrot.lane.b32.xlu0 %v454, 12
      %v840 = vpop.permute.xlu0 %839
      %841 = vrot.lane.b32.xlu0 %v455, 12
      %v842 = vpop.permute.xlu0 %841
      %843 = vrot.lane.b32.xlu0 %v456, 12
      %v844 = vpop.permute.xlu0 %843
      %v846 = vshrl.u32 %v456, 16
      %v848 = vshll.u32 %v456, 16
      %v850 = vrot.slane %v848, 1
      %v851 = vor.u32 %v846, %v850
      %v853 = vshll.u32 %v473, 16
      %v855 = vrot.slane %v853, 1
      %v856 = vsel %vm474, %v851, %v855
      %857 = vrot.lane.b32.xlu0 %v498, 16
      %v858 = vpop.permute.xlu0 %857
      %859 = vrot.lane.b32.xlu0 %v510, 16
      %v860 = vpop.permute.xlu0 %859
      %861 = vrot.lane.b32.xlu0 %v522, 16
      %v862 = vpop.permute.xlu0 %861
      %863 = vrot.lane.b32.xlu0 %v534, 16
      %v864 = vpop.permute.xlu0 %863
      %865 = vrot.lane.b32.xlu0 %v546, 16
      %v866 = vpop.permute.xlu0 %865
      %867 = vrot.lane.b32.xlu0 %v558, 16
      %v868 = vpop.permute.xlu0 %867
      %869 = vrot.lane.b32.xlu0 %v570, 16
      %v870 = vpop.permute.xlu0 %869
      %871 = vrot.lane.b32.xlu0 %v582, 16
      %v872 = vpop.permute.xlu0 %871
      %873 = vrot.lane.b32.xlu0 %v594, 16
      %v874 = vpop.permute.xlu0 %873
      %875 = vrot.lane.b32.xlu0 %v606, 16
      %v876 = vpop.permute.xlu0 %875
      %877 = vrot.lane.b32.xlu0 %v618, 16
      %v878 = vpop.permute.xlu0 %877
      %879 = vrot.lane.b32.xlu0 %v630, 16
      %v880 = vpop.permute.xlu0 %879
      %881 = vrot.lane.b32.xlu0 %v642, 16
      %v882 = vpop.permute.xlu0 %881
      %883 = vrot.lane.b32.xlu0 %v654, 16
      %v884 = vpop.permute.xlu0 %883
      %885 = vrot.lane.b32.xlu0 %v666, 16
      %v886 = vpop.permute.xlu0 %885
      %887 = vrot.lane.b32.xlu0 %v856, 16
      %v888 = vpop.permute.xlu0 %887
      %v890 = vrot.slane %v456, 1
      %v891 = vrot.slane %v473, 1
      %v892 = vsel %vm731, %v890, %v891
      %893 = vrot.lane.b32.xlu0 %v737, 20
      %v894 = vpop.permute.xlu0 %893
      %895 = vrot.lane.b32.xlu0 %v740, 20
      %v896 = vpop.permute.xlu0 %895
      %897 = vrot.lane.b32.xlu0 %v743, 20
      %v898 = vpop.permute.xlu0 %897
      %899 = vrot.lane.b32.xlu0 %v746, 20
      %v900 = vpop.permute.xlu0 %899
      %901 = vrot.lane.b32.xlu0 %v749, 20
      %v902 = vpop.permute.xlu0 %901
      %903 = vrot.lane.b32.xlu0 %v752, 20
      %v904 = vpop.permute.xlu0 %903
      %905 = vrot.lane.b32.xlu0 %v755, 20
      %v906 = vpop.permute.xlu0 %905
      %907 = vrot.lane.b32.xlu0 %v758, 20
      %v908 = vpop.permute.xlu0 %907
      %909 = vrot.lane.b32.xlu0 %v761, 20
      %v910 = vpop.permute.xlu0 %909
      %911 = vrot.lane.b32.xlu0 %v764, 20
      %v912 = vpop.permute.xlu0 %911
      %913 = vrot.lane.b32.xlu0 %v767, 20
      %v914 = vpop.permute.xlu0 %913
      %915 = vrot.lane.b32.xlu0 %v770, 20
      %v916 = vpop.permute.xlu0 %915
      %917 = vrot.lane.b32.xlu0 %v773, 20
      %v918 = vpop.permute.xlu0 %917
      %919 = vrot.lane.b32.xlu0 %v776, 20
      %v920 = vpop.permute.xlu0 %919
      %921 = vrot.lane.b32.xlu0 %v779, 20
      %v922 = vpop.permute.xlu0 %921
      %923 = vrot.lane.b32.xlu0 %v892, 20
      %v924 = vpop.permute.xlu0 %923
      %925 = vrot.lane.b32.xlu0 %v442, 24
      %v926 = vpop.permute.xlu0 %925
      %927 = vrot.lane.b32.xlu0 %v443, 24
      %v928 = vpop.permute.xlu0 %927
      %929 = vrot.lane.b32.xlu0 %v444, 24
      %v930 = vpop.permute.xlu0 %929
      %931 = vrot.lane.b32.xlu0 %v445, 24
      %v932 = vpop.permute.xlu0 %931
      %933 = vrot.lane.b32.xlu0 %v446, 24
      %v934 = vpop.permute.xlu0 %933
      %935 = vrot.lane.b32.xlu0 %v447, 24
      %v936 = vpop.permute.xlu0 %935
      %937 = vrot.lane.b32.xlu0 %v448, 24
      %v938 = vpop.permute.xlu0 %937
      %939 = vrot.lane.b32.xlu0 %v449, 24
      %v940 = vpop.permute.xlu0 %939
      %941 = vrot.lane.b32.xlu0 %v450, 24
      %v942 = vpop.permute.xlu0 %941
      %943 = vrot.lane.b32.xlu0 %v451, 24
      %v944 = vpop.permute.xlu0 %943
      %945 = vrot.lane.b32.xlu0 %v452, 24
      %v946 = vpop.permute.xlu0 %945
      %947 = vrot.lane.b32.xlu0 %v453, 24
      %v948 = vpop.permute.xlu0 %947
      %949 = vrot.lane.b32.xlu0 %v454, 24
      %v950 = vpop.permute.xlu0 %949
      %951 = vrot.lane.b32.xlu0 %v455, 24
      %v952 = vpop.permute.xlu0 %951
      %953 = vrot.lane.b32.xlu0 %v456, 24
      %v954 = vpop.permute.xlu0 %953
      %955 = vrot.lane.b32.xlu0 %v440, 24
      %v956 = vpop.permute.xlu0 %955
      %957 = vrot.lane.b32.xlu0 %v510, 28
      %v958 = vpop.permute.xlu0 %957
      %959 = vrot.lane.b32.xlu0 %v522, 28
      %v960 = vpop.permute.xlu0 %959
      %961 = vrot.lane.b32.xlu0 %v534, 28
      %v962 = vpop.permute.xlu0 %961
      %963 = vrot.lane.b32.xlu0 %v546, 28
      %v964 = vpop.permute.xlu0 %963
      %965 = vrot.lane.b32.xlu0 %v558, 28
      %v966 = vpop.permute.xlu0 %965
      %967 = vrot.lane.b32.xlu0 %v570, 28
      %v968 = vpop.permute.xlu0 %967
      %969 = vrot.lane.b32.xlu0 %v582, 28
      %v970 = vpop.permute.xlu0 %969
      %971 = vrot.lane.b32.xlu0 %v594, 28
      %v972 = vpop.permute.xlu0 %971
      %973 = vrot.lane.b32.xlu0 %v606, 28
      %v974 = vpop.permute.xlu0 %973
      %975 = vrot.lane.b32.xlu0 %v618, 28
      %v976 = vpop.permute.xlu0 %975
      %977 = vrot.lane.b32.xlu0 %v630, 28
      %v978 = vpop.permute.xlu0 %977
      %979 = vrot.lane.b32.xlu0 %v642, 28
      %v980 = vpop.permute.xlu0 %979
      %981 = vrot.lane.b32.xlu0 %v654, 28
      %v982 = vpop.permute.xlu0 %981
      %983 = vrot.lane.b32.xlu0 %v666, 28
      %v984 = vpop.permute.xlu0 %983
      %985 = vrot.lane.b32.xlu0 %v856, 28
      %v986 = vpop.permute.xlu0 %985
      %987 = vrot.lane.b32.xlu0 %v486, 28
      %v988 = vpop.permute.xlu0 %987
      %989 = vrot.lane.b32.xlu0 %v740, 32
      %v990 = vpop.permute.xlu0 %989
      %991 = vrot.lane.b32.xlu0 %v743, 32
      %v992 = vpop.permute.xlu0 %991
      %993 = vrot.lane.b32.xlu0 %v746, 32
      %v994 = vpop.permute.xlu0 %993
      %995 = vrot.lane.b32.xlu0 %v749, 32
      %v996 = vpop.permute.xlu0 %995
      %997 = vrot.lane.b32.xlu0 %v752, 32
      %v998 = vpop.permute.xlu0 %997
      %999 = vrot.lane.b32.xlu0 %v755, 32
      %v1000 = vpop.permute.xlu0 %999
      %1001 = vrot.lane.b32.xlu0 %v758, 32
      %v1002 = vpop.permute.xlu0 %1001
      %1003 = vrot.lane.b32.xlu0 %v761, 32
      %v1004 = vpop.permute.xlu0 %1003
      %1005 = vrot.lane.b32.xlu0 %v764, 32
      %v1006 = vpop.permute.xlu0 %1005
      %1007 = vrot.lane.b32.xlu0 %v767, 32
      %v1008 = vpop.permute.xlu0 %1007
      %1009 = vrot.lane.b32.xlu0 %v770, 32
      %v1010 = vpop.permute.xlu0 %1009
      %1011 = vrot.lane.b32.xlu0 %v773, 32
      %v1012 = vpop.permute.xlu0 %1011
      %1013 = vrot.lane.b32.xlu0 %v776, 32
      %v1014 = vpop.permute.xlu0 %1013
      %1015 = vrot.lane.b32.xlu0 %v779, 32
      %v1016 = vpop.permute.xlu0 %1015
      %1017 = vrot.lane.b32.xlu0 %v892, 32
      %v1018 = vpop.permute.xlu0 %1017
      %1019 = vrot.lane.b32.xlu0 %v734, 32
      %v1020 = vpop.permute.xlu0 %1019
      %vm1021 = vcmask 31744
      %v1023 = vsel %vm1021, %v440, %v668
      %v1025 = vsel %vm1021, %v441, %v670
      %v1027 = vsel %vm1021, %v442, %v672
      %v1029 = vsel %vm1021, %v443, %v674
      %v1031 = vsel %vm1021, %v444, %v676
      %v1033 = vsel %vm1021, %v445, %v678
      %v1035 = vsel %vm1021, %v446, %v680
      %v1037 = vsel %vm1021, %v447, %v682
      %v1039 = vsel %vm1021, %v448, %v684
      %v1041 = vsel %vm1021, %v449, %v686
      %v1043 = vsel %vm1021, %v450, %v688
      %v1045 = vsel %vm1021, %v451, %v690
      %v1047 = vsel %vm1021, %v452, %v692
      %v1049 = vsel %vm1021, %v453, %v694
      %v1051 = vsel %vm1021, %v454, %v696
      %v1053 = vsel %vm1021, %v455, %v698
      %vm1054 = vcmask 64512
      %v1056 = vsel %vm1054, %v1023, %v781
      %v1058 = vsel %vm1054, %v1025, %v783
      %v1060 = vsel %vm1054, %v1027, %v785
      %v1062 = vsel %vm1054, %v1029, %v787
      %v1064 = vsel %vm1054, %v1031, %v789
      %v1066 = vsel %vm1054, %v1033, %v791
      %v1068 = vsel %vm1054, %v1035, %v793
      %v1070 = vsel %vm1054, %v1037, %v795
      %v1072 = vsel %vm1054, %v1039, %v797
      %v1074 = vsel %vm1054, %v1041, %v799
      %v1076 = vsel %vm1054, %v1043, %v801
      %v1078 = vsel %vm1054, %v1045, %v803
      %v1080 = vsel %vm1054, %v1047, %v805
      %v1082 = vsel %vm1054, %v1049, %v807
      %v1084 = vsel %vm1054, %v1051, %v809
      %v1086 = vsel %vm1054, %v1053, %v811
      %vm1087 = vcmask 97280
      %v1089 = vsel %vm1087, %v1056, %v814
      %v1091 = vsel %vm1087, %v1058, %v816
      %v1093 = vsel %vm1087, %v1060, %v818
      %v1095 = vsel %vm1087, %v1062, %v820
      %v1097 = vsel %vm1087, %v1064, %v822
      %v1099 = vsel %vm1087, %v1066, %v824
      %v1101 = vsel %vm1087, %v1068, %v826
      %v1103 = vsel %vm1087, %v1070, %v828
      %v1105 = vsel %vm1087, %v1072, %v830
      %v1107 = vsel %vm1087, %v1074, %v832
      %v1109 = vsel %vm1087, %v1076, %v834
      %v1111 = vsel %vm1087, %v1078, %v836
      %v1113 = vsel %vm1087, %v1080, %v838
      %v1115 = vsel %vm1087, %v1082, %v840
      %v1117 = vsel %vm1087, %v1084, %v842
      %v1119 = vsel %vm1087, %v1086, %v844
      %vm1120 = vcmask 130048
      %v1122 = vsel %vm1120, %v1089, %v858
      %v1124 = vsel %vm1120, %v1091, %v860
      %v1126 = vsel %vm1120, %v1093, %v862
      %v1128 = vsel %vm1120, %v1095, %v864
      %v1130 = vsel %vm1120, %v1097, %v866
      %v1132 = vsel %vm1120, %v1099, %v868
      %v1134 = vsel %vm1120, %v1101, %v870
      %v1136 = vsel %vm1120, %v1103, %v872
      %v1138 = vsel %vm1120, %v1105, %v874
      %v1140 = vsel %vm1120, %v1107, %v876
      %v1142 = vsel %vm1120, %v1109, %v878
      %v1144 = vsel %vm1120, %v1111, %v880
      %v1146 = vsel %vm1120, %v1113, %v882
      %v1148 = vsel %vm1120, %v1115, %v884
      %v1150 = vsel %vm1120, %v1117, %v886
      %v1152 = vsel %vm1120, %v1119, %v888
      %vm1153 = vcmask 162816
      %v1155 = vsel %vm1153, %v1122, %v894
      %v1157 = vsel %vm1153, %v1124, %v896
      %v1159 = vsel %vm1153, %v1126, %v898
      %v1161 = vsel %vm1153, %v1128, %v900
      %v1163 = vsel %vm1153, %v1130, %v902
      %v1165 = vsel %vm1153, %v1132, %v904
      %v1167 = vsel %vm1153, %v1134, %v906
      %v1169 = vsel %vm1153, %v1136, %v908
      %v1171 = vsel %vm1153, %v1138, %v910
      %v1173 = vsel %vm1153, %v1140, %v912
      %v1175 = vsel %vm1153, %v1142, %v914
      %v1177 = vsel %vm1153, %v1144, %v916
      %v1179 = vsel %vm1153, %v1146, %v918
      %v1181 = vsel %vm1153, %v1148, %v920
      %v1183 = vsel %vm1153, %v1150, %v922
      %v1185 = vsel %vm1153, %v1152, %v924
      %vm1186 = vcmask 195584
      %v1188 = vsel %vm1186, %v1155, %v926
      %v1190 = vsel %vm1186, %v1157, %v928
      %v1192 = vsel %vm1186, %v1159, %v930
      %v1194 = vsel %vm1186, %v1161, %v932
      %v1196 = vsel %vm1186, %v1163, %v934
      %v1198 = vsel %vm1186, %v1165, %v936
      %v1200 = vsel %vm1186, %v1167, %v938
      %v1202 = vsel %vm1186, %v1169, %v940
      %v1204 = vsel %vm1186, %v1171, %v942
      %v1206 = vsel %vm1186, %v1173, %v944
      %v1208 = vsel %vm1186, %v1175, %v946
      %v1210 = vsel %vm1186, %v1177, %v948
      %v1212 = vsel %vm1186, %v1179, %v950
      %v1214 = vsel %vm1186, %v1181, %v952
      %v1216 = vsel %vm1186, %v1183, %v954
      %v1218 = vsel %vm1186, %v1185, %v956
      %vm1219 = vcmask 228352
      %v1221 = vsel %vm1219, %v1188, %v958
      %v1223 = vsel %vm1219, %v1190, %v960
      %v1225 = vsel %vm1219, %v1192, %v962
      %v1227 = vsel %vm1219, %v1194, %v964
      %v1229 = vsel %vm1219, %v1196, %v966
      %v1231 = vsel %vm1219, %v1198, %v968
      %v1233 = vsel %vm1219, %v1200, %v970
      %v1235 = vsel %vm1219, %v1202, %v972
      %v1237 = vsel %vm1219, %v1204, %v974
      %v1239 = vsel %vm1219, %v1206, %v976
      %v1241 = vsel %vm1219, %v1208, %v978
      %v1243 = vsel %vm1219, %v1210, %v980
      %v1245 = vsel %vm1219, %v1212, %v982
      %v1247 = vsel %vm1219, %v1214, %v984
      %v1249 = vsel %vm1219, %v1216, %v986
      %v1251 = vsel %vm1219, %v1218, %v988
      %vm1252 = vcmask 261120
      %v1254 = vsel %vm1252, %v1221, %v990
      %v1256 = vsel %vm1252, %v1223, %v992
      %v1258 = vsel %vm1252, %v1225, %v994
      %v1260 = vsel %vm1252, %v1227, %v996
      %v1262 = vsel %vm1252, %v1229, %v998
      %v1264 = vsel %vm1252, %v1231, %v1000
      %v1266 = vsel %vm1252, %v1233, %v1002
      %v1268 = vsel %vm1252, %v1235, %v1004
      %v1270 = vsel %vm1252, %v1237, %v1006
      %v1272 = vsel %vm1252, %v1239, %v1008
      %v1274 = vsel %vm1252, %v1241, %v1010
      %v1276 = vsel %vm1252, %v1243, %v1012
      %v1278 = vsel %vm1252, %v1245, %v1014
      %v1280 = vsel %vm1252, %v1247, %v1016
      %v1282 = vsel %vm1252, %v1249, %v1018
      %v1284 = vsel %vm1252, %v1251, %v1020
      %v1285 = vld [vmem:[%s1] sm:$0xf]
      %v1286 = vld [vmem:[%s1 + $0x4] sm:$0xf]
      %v1287 = vld [vmem:[%s1 + $0x8] sm:$0xf]
      %v1288 = vld [vmem:[%s1 + $0xc] sm:$0xf]
      %v1289 = vld [vmem:[%s1 + $0x10] sm:$0x3]
      %v1295 = vunpack.c.l.b16 %v1285
      %v1296 = vunpack.c.l.b16 %v1286
      %v1297 = vunpack.c.l.b16 %v1287
      %v1298 = vunpack.c.l.b16 %v1288
      %v1299 = vunpack.c.l.b16 %v1289
      %v1300 = vpack.c.b16 %v1296, %v1295
      %v1301 = vpack.c.b16 %v1298, %v1297
      %v1302 = vpack.c.b16 %v1299, %v1299
      %vm1305 = vcmask 293888
      %v1306 = vsel %vm1305, %v1254, 0
      %v1308 = vsel %vm1305, %v1256, 0
      %v1310 = vsel %vm1305, %v1258, 0
      %v1312 = vsel %vm1305, %v1260, 0
      %v1314 = vsel %vm1305, %v1262, 0
      %v1316 = vsel %vm1305, %v1264, 0
      %v1318 = vsel %vm1305, %v1266, 0
      %v1320 = vsel %vm1305, %v1268, 0
      %v1322 = vsel %vm1305, %v1270, 0
      %v1324 = vsel %vm1305, %v1272, 0
      %v1326 = vsel %vm1305, %v1274, 0
      %v1328 = vsel %vm1305, %v1276, 0
      %v1330 = vsel %vm1305, %v1278, 0
      %v1332 = vsel %vm1305, %v1280, 0
      %v1334 = vsel %vm1305, %v1282, 0
      %v1336 = vsel %vm1305, %v1284, 0
      %vm1338 = vcmask 1041408
      %v1340 = vsel %vm1338, %v1302, 0
      %1342 = vmatpush.bf16.msra.mxu0 0
      %1343 = vmatpush.bf16.msra.mxu0 0
      %1344 = vmatpush.bf16.msra.mxu0 0
      %1345 = vmatpush.bf16.msra.mxu0 0
      %1346 = vmatpush.bf16.msra.mxu0 0
      %1347 = vmatpush.bf16.msra.mxu0 %v1340
      %1348 = vmatpush.bf16.msra.mxu0 %v1301
      %1349 = vmatpush.bf16.msra.mxu0 %v1300
      %1350 = vmatmul.bf16.gmra.mxu0 %v1306
      %v1351 = vpop.f32.mrf.mxu0
      %v1352 = vadd.f32 0.0, %v1351
      %v1353 = vpop.f32.mrf.mxu0
      %v1354 = vadd.f32 0.0, %v1353
      %1355 = vmatmul.bf16.gmra.mxu0 %v1308
      %v1356 = vpop.f32.mrf.mxu0
      %v1357 = vadd.f32 0.0, %v1356
      %v1358 = vpop.f32.mrf.mxu0
      %v1359 = vadd.f32 0.0, %v1358
      %1360 = vmatmul.bf16.gmra.mxu0 %v1310
      %v1361 = vpop.f32.mrf.mxu0
      %v1362 = vadd.f32 0.0, %v1361
      %v1363 = vpop.f32.mrf.mxu0
      %v1364 = vadd.f32 0.0, %v1363
      %1365 = vmatmul.bf16.gmra.mxu0 %v1312
      %v1366 = vpop.f32.mrf.mxu0
      %v1367 = vadd.f32 0.0, %v1366
      %v1368 = vpop.f32.mrf.mxu0
      %v1369 = vadd.f32 0.0, %v1368
      %1370 = vmatmul.bf16.gmra.mxu0 %v1314
      %v1371 = vpop.f32.mrf.mxu0
      %v1372 = vadd.f32 0.0, %v1371
      %v1373 = vpop.f32.mrf.mxu0
      %v1374 = vadd.f32 0.0, %v1373
      %1375 = vmatmul.bf16.gmra.mxu0 %v1316
      %v1376 = vpop.f32.mrf.mxu0
      %v1377 = vadd.f32 0.0, %v1376
      %v1378 = vpop.f32.mrf.mxu0
      %v1379 = vadd.f32 0.0, %v1378
      %1380 = vmatmul.bf16.gmra.mxu0 %v1318
      %v1381 = vpop.f32.mrf.mxu0
      %v1382 = vadd.f32 0.0, %v1381
      %v1383 = vpop.f32.mrf.mxu0
      %v1384 = vadd.f32 0.0, %v1383
      %1385 = vmatmul.bf16.gmra.mxu0 %v1320
      %v1386 = vpop.f32.mrf.mxu0
      %v1387 = vadd.f32 0.0, %v1386
      %v1388 = vpop.f32.mrf.mxu0
      %v1389 = vadd.f32 0.0, %v1388
      %1390 = vmatmul.bf16.gmra.mxu0 %v1322
      %v1391 = vpop.f32.mrf.mxu0
      %v1392 = vadd.f32 0.0, %v1391
      %v1393 = vpop.f32.mrf.mxu0
      %v1394 = vadd.f32 0.0, %v1393
      %1395 = vmatmul.bf16.gmra.mxu0 %v1324
      %v1396 = vpop.f32.mrf.mxu0
      %v1397 = vadd.f32 0.0, %v1396
      %v1398 = vpop.f32.mrf.mxu0
      %v1399 = vadd.f32 0.0, %v1398
      %1400 = vmatmul.bf16.gmra.mxu0 %v1326
      %v1401 = vpop.f32.mrf.mxu0
      %v1402 = vadd.f32 0.0, %v1401
      %v1403 = vpop.f32.mrf.mxu0
      %v1404 = vadd.f32 0.0, %v1403
      %1405 = vmatmul.bf16.gmra.mxu0 %v1328
      %v1406 = vpop.f32.mrf.mxu0
      %v1407 = vadd.f32 0.0, %v1406
      %v1408 = vpop.f32.mrf.mxu0
      %v1409 = vadd.f32 0.0, %v1408
      %1410 = vmatmul.bf16.gmra.mxu0 %v1330
      %v1411 = vpop.f32.mrf.mxu0
      %v1412 = vadd.f32 0.0, %v1411
      %v1413 = vpop.f32.mrf.mxu0
      %v1414 = vadd.f32 0.0, %v1413
      %1415 = vmatmul.bf16.gmra.mxu0 %v1332
      %v1416 = vpop.f32.mrf.mxu0
      %v1417 = vadd.f32 0.0, %v1416
      %v1418 = vpop.f32.mrf.mxu0
      %v1419 = vadd.f32 0.0, %v1418
      %1420 = vmatmul.bf16.gmra.mxu0 %v1334
      %v1421 = vpop.f32.mrf.mxu0
      %v1422 = vadd.f32 0.0, %v1421
      %v1423 = vpop.f32.mrf.mxu0
      %v1424 = vadd.f32 0.0, %v1423
      %1425 = vmatmul.bf16.gmra.mxu0 %v1336
      %v1426 = vpop.f32.mrf.mxu0
      %v1427 = vadd.f32 0.0, %v1426
      %v1428 = vpop.f32.mrf.mxu0
      %v1429 = vadd.f32 0.0, %v1428
      %1430 = vdwg.mxu0
      %v1431 = vsel %vm1054, %v1352, 0.0
      %v1432 = vsel %vm1054, %v1354, 0.0
      %v1433 = vadd.f32 %v1431, %v1432
      %v1434 = vsel %vm1054, %v1357, 0.0
      %v1435 = vadd.f32 %v1433, %v1434
      %v1436 = vsel %vm1054, %v1359, 0.0
      %v1437 = vadd.f32 %v1435, %v1436
      %v1438 = vsel %vm1054, %v1362, 0.0
      %v1439 = vadd.f32 %v1437, %v1438
      %v1440 = vsel %vm1054, %v1364, 0.0
      %v1441 = vadd.f32 %v1439, %v1440
      %v1442 = vsel %vm1054, %v1367, 0.0
      %v1443 = vadd.f32 %v1441, %v1442
      %v1444 = vsel %vm1054, %v1369, 0.0
      %v1445 = vadd.f32 %v1443, %v1444
      %v1446 = vsel %vm1054, %v1372, 0.0
      %v1447 = vadd.f32 %v1445, %v1446
      %v1448 = vsel %vm1054, %v1374, 0.0
      %v1449 = vadd.f32 %v1447, %v1448
      %v1450 = vsel %vm1054, %v1377, 0.0
      %v1451 = vadd.f32 %v1449, %v1450
      %v1452 = vsel %vm1054, %v1379, 0.0
      %v1453 = vadd.f32 %v1451, %v1452
      %v1454 = vsel %vm1054, %v1382, 0.0
      %v1455 = vadd.f32 %v1453, %v1454
      %v1456 = vsel %vm1054, %v1384, 0.0
      %v1457 = vadd.f32 %v1455, %v1456
      %v1458 = vsel %vm1054, %v1387, 0.0
      %v1459 = vadd.f32 %v1457, %v1458
      %v1460 = vsel %vm1054, %v1389, 0.0
      %v1461 = vadd.f32 %v1459, %v1460
      %v1462 = vsel %vm1054, %v1392, 0.0
      %v1463 = vadd.f32 %v1461, %v1462
      %v1464 = vsel %vm1054, %v1394, 0.0
      %v1465 = vadd.f32 %v1463, %v1464
      %v1466 = vsel %vm1054, %v1397, 0.0
      %v1467 = vadd.f32 %v1465, %v1466
      %v1468 = vsel %vm1054, %v1399, 0.0
      %v1469 = vadd.f32 %v1467, %v1468
      %v1470 = vsel %vm1054, %v1402, 0.0
      %v1471 = vadd.f32 %v1469, %v1470
      %v1472 = vsel %vm1054, %v1404, 0.0
      %v1473 = vadd.f32 %v1471, %v1472
      %v1474 = vsel %vm1054, %v1407, 0.0
      %v1475 = vadd.f32 %v1473, %v1474
      %v1476 = vsel %vm1054, %v1409, 0.0
      %v1477 = vadd.f32 %v1475, %v1476
      %v1478 = vsel %vm1054, %v1412, 0.0
      %v1479 = vadd.f32 %v1477, %v1478
      %v1480 = vsel %vm1054, %v1414, 0.0
      %v1481 = vadd.f32 %v1479, %v1480
      %v1482 = vsel %vm1054, %v1417, 0.0
      %v1483 = vadd.f32 %v1481, %v1482
      %v1484 = vsel %vm1054, %v1419, 0.0
      %v1485 = vadd.f32 %v1483, %v1484
      %v1486 = vsel %vm1054, %v1422, 0.0
      %v1487 = vadd.f32 %v1485, %v1486
      %v1488 = vsel %vm1054, %v1424, 0.0
      %v1489 = vadd.f32 %v1487, %v1488
      %v1490 = vsel %vm1054, %v1427, 0.0
      %v1491 = vadd.f32 %v1489, %v1490
      %v1492 = vsel %vm1054, %v1429, 0.0
      %v1493 = vadd.f32 %v1491, %v1492
      %v1494 = vrot.slane %v1493, 4
      %v1495 = vadd.f32 %v1493, %v1494
      %v1496 = vrot.slane %v1495, 2
      %v1497 = vadd.f32 %v1495, %v1496
      %v1498 = vrot.slane %v1497, 1
      %v1499 = vadd.f32 %v1497, %v1498
      %v1500 = vmul.f32 %v1499, 0.00390625
      %v1501 = vmul.f32 %v1352, %v1352
      %v1502 = vmul.f32 %v1354, %v1354
      %v1503 = vmul.f32 %v1357, %v1357
      %v1504 = vmul.f32 %v1359, %v1359
      %v1505 = vmul.f32 %v1362, %v1362
      %v1506 = vmul.f32 %v1364, %v1364
      %v1507 = vmul.f32 %v1367, %v1367
      %v1508 = vmul.f32 %v1369, %v1369
      %v1509 = vmul.f32 %v1372, %v1372
      %v1510 = vmul.f32 %v1374, %v1374
      %v1511 = vmul.f32 %v1377, %v1377
      %v1512 = vmul.f32 %v1379, %v1379
      %v1513 = vmul.f32 %v1382, %v1382
      %v1514 = vmul.f32 %v1384, %v1384
      %v1515 = vmul.f32 %v1387, %v1387
      %v1516 = vmul.f32 %v1389, %v1389
      %v1517 = vmul.f32 %v1392, %v1392
      %v1518 = vmul.f32 %v1394, %v1394
      %v1519 = vmul.f32 %v1397, %v1397
      %v1520 = vmul.f32 %v1399, %v1399
      %v1521 = vmul.f32 %v1402, %v1402
      %v1522 = vmul.f32 %v1404, %v1404
      %v1523 = vmul.f32 %v1407, %v1407
      %v1524 = vmul.f32 %v1409, %v1409
      %v1525 = vmul.f32 %v1412, %v1412
      %v1526 = vmul.f32 %v1414, %v1414
      %v1527 = vmul.f32 %v1417, %v1417
      %v1528 = vmul.f32 %v1419, %v1419
      %v1529 = vmul.f32 %v1422, %v1422
      %v1530 = vmul.f32 %v1424, %v1424
      %v1531 = vmul.f32 %v1427, %v1427
      %v1532 = vmul.f32 %v1429, %v1429
      %v1533 = vsel %vm1054, %v1501, 0.0
      %v1534 = vsel %vm1054, %v1502, 0.0
      %v1535 = vadd.f32 %v1533, %v1534
      %v1536 = vsel %vm1054, %v1503, 0.0
      %v1537 = vadd.f32 %v1535, %v1536
      %v1538 = vsel %vm1054, %v1504, 0.0
      %v1539 = vadd.f32 %v1537, %v1538
      %v1540 = vsel %vm1054, %v1505, 0.0
      %v1541 = vadd.f32 %v1539, %v1540
      %v1542 = vsel %vm1054, %v1506, 0.0
      %v1543 = vadd.f32 %v1541, %v1542
      %v1544 = vsel %vm1054, %v1507, 0.0
      %v1545 = vadd.f32 %v1543, %v1544
      %v1546 = vsel %vm1054, %v1508, 0.0
      %v1547 = vadd.f32 %v1545, %v1546
      %v1548 = vsel %vm1054, %v1509, 0.0
      %v1549 = vadd.f32 %v1547, %v1548
      %v1550 = vsel %vm1054, %v1510, 0.0
      %v1551 = vadd.f32 %v1549, %v1550
      %v1552 = vsel %vm1054, %v1511, 0.0
      %v1553 = vadd.f32 %v1551, %v1552
      %v1554 = vsel %vm1054, %v1512, 0.0
      %v1555 = vadd.f32 %v1553, %v1554
      %v1556 = vsel %vm1054, %v1513, 0.0
      %v1557 = vadd.f32 %v1555, %v1556
      %v1558 = vsel %vm1054, %v1514, 0.0
      %v1559 = vadd.f32 %v1557, %v1558
      %v1560 = vsel %vm1054, %v1515, 0.0
      %v1561 = vadd.f32 %v1559, %v1560
      %v1562 = vsel %vm1054, %v1516, 0.0
      %v1563 = vadd.f32 %v1561, %v1562
      %v1564 = vsel %vm1054, %v1517, 0.0
      %v1565 = vadd.f32 %v1563, %v1564
      %v1566 = vsel %vm1054, %v1518, 0.0
      %v1567 = vadd.f32 %v1565, %v1566
      %v1568 = vsel %vm1054, %v1519, 0.0
      %v1569 = vadd.f32 %v1567, %v1568
      %v1570 = vsel %vm1054, %v1520, 0.0
      %v1571 = vadd.f32 %v1569, %v1570
      %v1572 = vsel %vm1054, %v1521, 0.0
      %v1573 = vadd.f32 %v1571, %v1572
      %v1574 = vsel %vm1054, %v1522, 0.0
      %v1575 = vadd.f32 %v1573, %v1574
      %v1576 = vsel %vm1054, %v1523, 0.0
      %v1577 = vadd.f32 %v1575, %v1576
      %v1578 = vsel %vm1054, %v1524, 0.0
      %v1579 = vadd.f32 %v1577, %v1578
      %v1580 = vsel %vm1054, %v1525, 0.0
      %v1581 = vadd.f32 %v1579, %v1580
      %v1582 = vsel %vm1054, %v1526, 0.0
      %v1583 = vadd.f32 %v1581, %v1582
      %v1584 = vsel %vm1054, %v1527, 0.0
      %v1585 = vadd.f32 %v1583, %v1584
      %v1586 = vsel %vm1054, %v1528, 0.0
      %v1587 = vadd.f32 %v1585, %v1586
      %v1588 = vsel %vm1054, %v1529, 0.0
      %v1589 = vadd.f32 %v1587, %v1588
      %v1590 = vsel %vm1054, %v1530, 0.0
      %v1591 = vadd.f32 %v1589, %v1590
      %v1592 = vsel %vm1054, %v1531, 0.0
      %v1593 = vadd.f32 %v1591, %v1592
      %v1594 = vsel %vm1054, %v1532, 0.0
      %v1595 = vadd.f32 %v1593, %v1594
      %v1596 = vrot.slane %v1595, 4
      %v1597 = vadd.f32 %v1595, %v1596
      %v1598 = vrot.slane %v1597, 2
      %v1599 = vadd.f32 %v1597, %v1598
      %v1600 = vrot.slane %v1599, 1
      %v1601 = vadd.f32 %v1599, %v1600
      %v1602 = vmul.f32 %v1601, 0.00390625
      %v1603 = vmul.f32 %v1500, %v1500
      %v1604 = vsub.f32 %v1602, %v1603
      %v1605 = vsub.f32 %v1352, %v1500
      %v1606 = vsub.f32 %v1354, %v1500
      %v1607 = vsub.f32 %v1357, %v1500
      %v1608 = vsub.f32 %v1359, %v1500
      %v1609 = vsub.f32 %v1362, %v1500
      %v1610 = vsub.f32 %v1364, %v1500
      %v1611 = vsub.f32 %v1367, %v1500
      %v1612 = vsub.f32 %v1369, %v1500
      %v1613 = vsub.f32 %v1372, %v1500
      %v1614 = vsub.f32 %v1374, %v1500
      %v1615 = vsub.f32 %v1377, %v1500
      %v1616 = vsub.f32 %v1379, %v1500
      %v1617 = vsub.f32 %v1382, %v1500
      %v1618 = vsub.f32 %v1384, %v1500
      %v1619 = vsub.f32 %v1387, %v1500
      %v1620 = vsub.f32 %v1389, %v1500
      %v1621 = vsub.f32 %v1392, %v1500
      %v1622 = vsub.f32 %v1394, %v1500
      %v1623 = vsub.f32 %v1397, %v1500
      %v1624 = vsub.f32 %v1399, %v1500
      %v1625 = vsub.f32 %v1402, %v1500
      %v1626 = vsub.f32 %v1404, %v1500
      %v1627 = vsub.f32 %v1407, %v1500
      %v1628 = vsub.f32 %v1409, %v1500
      %v1629 = vsub.f32 %v1412, %v1500
      %v1630 = vsub.f32 %v1414, %v1500
      %v1631 = vsub.f32 %v1417, %v1500
      %v1632 = vsub.f32 %v1419, %v1500
      %v1633 = vsub.f32 %v1422, %v1500
      %v1634 = vsub.f32 %v1424, %v1500
      %v1635 = vsub.f32 %v1427, %v1500
      %v1636 = vsub.f32 %v1429, %v1500
      %v1637 = vadd.f32 %v1604, 1e-05
      %v1638 = vrsqrt.pop %v1637
      %v1639 = vmul.f32 %v1638, %v1637
      %v1640 = vmul.f32 %v1639, %v1638
      %v1641 = vmul.f32 0.5, %v1640
      %v1642 = vsub.f32 1.5, %v1641
      %v1643 = vmul.f32 %v1638, %v1642
      %vm1644 = vweird.f32 %v1637
      %vm1645 = vweird.f32 %v1638
      %vm1646 = vmor %vm1644, %vm1645
      %v1647 = vsel %vm1646, %v1638, %v1643
      %v1648 = vmul.f32 %v1605, %v1647
      %v1649 = vmul.f32 %v1606, %v1647
      %v1650 = vmul.f32 %v1607, %v1647
      %v1651 = vmul.f32 %v1608, %v1647
      %v1652 = vmul.f32 %v1609, %v1647
      %v1653 = vmul.f32 %v1610, %v1647
      %v1654 = vmul.f32 %v1611, %v1647
      %v1655 = vmul.f32 %v1612, %v1647
      %v1656 = vmul.f32 %v1613, %v1647
      %v1657 = vmul.f32 %v1614, %v1647
      %v1658 = vmul.f32 %v1615, %v1647
      %v1659 = vmul.f32 %v1616, %v1647
      %v1660 = vmul.f32 %v1617, %v1647
      %v1661 = vmul.f32 %v1618, %v1647
      %v1662 = vmul.f32 %v1619, %v1647
      %v1663 = vmul.f32 %v1620, %v1647
      %v1664 = vmul.f32 %v1621, %v1647
      %v1665 = vmul.f32 %v1622, %v1647
      %v1666 = vmul.f32 %v1623, %v1647
      %v1667 = vmul.f32 %v1624, %v1647
      %v1668 = vmul.f32 %v1625, %v1647
      %v1669 = vmul.f32 %v1626, %v1647
      %v1670 = vmul.f32 %v1627, %v1647
      %v1671 = vmul.f32 %v1628, %v1647
      %v1672 = vmul.f32 %v1629, %v1647
      %v1673 = vmul.f32 %v1630, %v1647
      %v1674 = vmul.f32 %v1631, %v1647
      %v1675 = vmul.f32 %v1632, %v1647
      %v1676 = vmul.f32 %v1633, %v1647
      %v1677 = vmul.f32 %v1634, %v1647
      %v1678 = vmul.f32 %v1635, %v1647
      %v1679 = vmul.f32 %v1636, %v1647
      %vm1680 = vcmp.ge.f32.partialorder %v1648, 0.0
      %vm1681 = vcmp.ge.f32.partialorder %v1649, 0.0
      %vm1682 = vcmp.ge.f32.partialorder %v1650, 0.0
      %vm1683 = vcmp.ge.f32.partialorder %v1651, 0.0
      %vm1684 = vcmp.ge.f32.partialorder %v1652, 0.0
      %vm1685 = vcmp.ge.f32.partialorder %v1653, 0.0
      %vm1686 = vcmp.ge.f32.partialorder %v1654, 0.0
      %vm1687 = vcmp.ge.f32.partialorder %v1655, 0.0
      %vm1688 = vcmp.ge.f32.partialorder %v1656, 0.0
      %vm1689 = vcmp.ge.f32.partialorder %v1657, 0.0
      %vm1690 = vcmp.ge.f32.partialorder %v1658, 0.0
      %vm1691 = vcmp.ge.f32.partialorder %v1659, 0.0
      %vm1692 = vcmp.ge.f32.partialorder %v1660, 0.0
      %vm1693 = vcmp.ge.f32.partialorder %v1661, 0.0
      %vm1694 = vcmp.ge.f32.partialorder %v1662, 0.0
      %vm1695 = vcmp.ge.f32.partialorder %v1663, 0.0
      %vm1696 = vcmp.ge.f32.partialorder %v1664, 0.0
      %vm1697 = vcmp.ge.f32.partialorder %v1665, 0.0
      %vm1698 = vcmp.ge.f32.partialorder %v1666, 0.0
      %vm1699 = vcmp.ge.f32.partialorder %v1667, 0.0
      %vm1700 = vcmp.ge.f32.partialorder %v1668, 0.0
      %vm1701 = vcmp.ge.f32.partialorder %v1669, 0.0
      %vm1702 = vcmp.ge.f32.partialorder %v1670, 0.0
      %vm1703 = vcmp.ge.f32.partialorder %v1671, 0.0
      %vm1704 = vcmp.ge.f32.partialorder %v1672, 0.0
      %vm1705 = vcmp.ge.f32.partialorder %v1673, 0.0
      %vm1706 = vcmp.ge.f32.partialorder %v1674, 0.0
      %vm1707 = vcmp.ge.f32.partialorder %v1675, 0.0
      %vm1708 = vcmp.ge.f32.partialorder %v1676, 0.0
      %vm1709 = vcmp.ge.f32.partialorder %v1677, 0.0
      %vm1710 = vcmp.ge.f32.partialorder %v1678, 0.0
      %vm1711 = vcmp.ge.f32.partialorder %v1679, 0.0
      %v1712 = vmul.f32 %v1648, 0.2
      %v1713 = vmul.f32 %v1649, 0.2
      %v1714 = vmul.f32 %v1650, 0.2
      %v1715 = vmul.f32 %v1651, 0.2
      %v1716 = vmul.f32 %v1652, 0.2
      %v1717 = vmul.f32 %v1653, 0.2
      %v1718 = vmul.f32 %v1654, 0.2
      %v1719 = vmul.f32 %v1655, 0.2
      %v1720 = vmul.f32 %v1656, 0.2
      %v1721 = vmul.f32 %v1657, 0.2
      %v1722 = vmul.f32 %v1658, 0.2
      %v1723 = vmul.f32 %v1659, 0.2
      %v1724 = vmul.f32 %v1660, 0.2
      %v1725 = vmul.f32 %v1661, 0.2
      %v1726 = vmul.f32 %v1662, 0.2
      %v1727 = vmul.f32 %v1663, 0.2
      %v1728 = vmul.f32 %v1664, 0.2
      %v1729 = vmul.f32 %v1665, 0.2
      %v1730 = vmul.f32 %v1666, 0.2
      %v1731 = vmul.f32 %v1667, 0.2
      %v1732 = vmul.f32 %v1668, 0.2
      %v1733 = vmul.f32 %v1669, 0.2
      %v1734 = vmul.f32 %v1670, 0.2
      %v1735 = vmul.f32 %v1671, 0.2
      %v1736 = vmul.f32 %v1672, 0.2
      %v1737 = vmul.f32 %v1673, 0.2
      %v1738 = vmul.f32 %v1674, 0.2
      %v1739 = vmul.f32 %v1675, 0.2
      %v1740 = vmul.f32 %v1676, 0.2
      %v1741 = vmul.f32 %v1677, 0.2
      %v1742 = vmul.f32 %v1678, 0.2
      %v1743 = vmul.f32 %v1679, 0.2
      %v1744 = vsel %vm1680, %v1648, %v1712
      %v1745 = vsel %vm1681, %v1649, %v1713
      %v1746 = vsel %vm1682, %v1650, %v1714
      %v1747 = vsel %vm1683, %v1651, %v1715
      %v1748 = vsel %vm1684, %v1652, %v1716
      %v1749 = vsel %vm1685, %v1653, %v1717
      %v1750 = vsel %vm1686, %v1654, %v1718
      %v1751 = vsel %vm1687, %v1655, %v1719
      %v1752 = vsel %vm1688, %v1656, %v1720
      %v1753 = vsel %vm1689, %v1657, %v1721
      %v1754 = vsel %vm1690, %v1658, %v1722
      %v1755 = vsel %vm1691, %v1659, %v1723
      %v1756 = vsel %vm1692, %v1660, %v1724
      %v1757 = vsel %vm1693, %v1661, %v1725
      %v1758 = vsel %vm1694, %v1662, %v1726
      %v1759 = vsel %vm1695, %v1663, %v1727
      %v1760 = vsel %vm1696, %v1664, %v1728
      %v1761 = vsel %vm1697, %v1665, %v1729
      %v1762 = vsel %vm1698, %v1666, %v1730
      %v1763 = vsel %vm1699, %v1667, %v1731
      %v1764 = vsel %vm1700, %v1668, %v1732
      %v1765 = vsel %vm1701, %v1669, %v1733
      %v1766 = vsel %vm1702, %v1670, %v1734
      %v1767 = vsel %vm1703, %v1671, %v1735
      %v1768 = vsel %vm1704, %v1672, %v1736
      %v1769 = vsel %vm1705, %v1673, %v1737
      %v1770 = vsel %vm1706, %v1674, %v1738
      %v1771 = vsel %vm1707, %v1675, %v1739
      %v1772 = vsel %vm1708, %v1676, %v1740
      %v1773 = vsel %vm1709, %v1677, %v1741
      %v1774 = vsel %vm1710, %v1678, %v1742
      %v1775 = vsel %vm1711, %v1679, %v1743
      %v1776 = vpack.c.bf16 %v1744, %v1744
      %v1777 = vpack.c.bf16 %v1745, %v1745
      %v1778 = vpack.c.bf16 %v1746, %v1746
      %v1779 = vpack.c.bf16 %v1747, %v1747
      %v1780 = vpack.c.bf16 %v1748, %v1748
      %v1781 = vpack.c.bf16 %v1749, %v1749
      %v1782 = vpack.c.bf16 %v1750, %v1750
      %v1783 = vpack.c.bf16 %v1751, %v1751
      %v1784 = vpack.c.bf16 %v1752, %v1752
      %v1785 = vpack.c.bf16 %v1753, %v1753
      %v1786 = vpack.c.bf16 %v1754, %v1754
      %v1787 = vpack.c.bf16 %v1755, %v1755
      %v1788 = vpack.c.bf16 %v1756, %v1756
      %v1789 = vpack.c.bf16 %v1757, %v1757
      %v1790 = vpack.c.bf16 %v1758, %v1758
      %v1791 = vpack.c.bf16 %v1759, %v1759
      %v1792 = vpack.c.bf16 %v1760, %v1760
      %v1793 = vpack.c.bf16 %v1761, %v1761
      %v1794 = vpack.c.bf16 %v1762, %v1762
      %v1795 = vpack.c.bf16 %v1763, %v1763
      %v1796 = vpack.c.bf16 %v1764, %v1764
      %v1797 = vpack.c.bf16 %v1765, %v1765
      %v1798 = vpack.c.bf16 %v1766, %v1766
      %v1799 = vpack.c.bf16 %v1767, %v1767
      %v1800 = vpack.c.bf16 %v1768, %v1768
      %v1801 = vpack.c.bf16 %v1769, %v1769
      %v1802 = vpack.c.bf16 %v1770, %v1770
      %v1803 = vpack.c.bf16 %v1771, %v1771
      %v1804 = vpack.c.bf16 %v1772, %v1772
      %v1805 = vpack.c.bf16 %v1773, %v1773
      %v1806 = vpack.c.bf16 %v1774, %v1774
      %v1807 = vpack.c.bf16 %v1775, %v1775
      %v1840 = vunpack.c.l.b16 %v1776
      %v1841 = vunpack.c.l.b16 %v1777
      %v1842 = vunpack.c.l.b16 %v1778
      %v1843 = vunpack.c.l.b16 %v1779
      %v1844 = vunpack.c.l.b16 %v1780
      %v1845 = vunpack.c.l.b16 %v1781
      %v1846 = vunpack.c.l.b16 %v1782
      %v1847 = vunpack.c.l.b16 %v1783
      %v1848 = vunpack.c.l.b16 %v1784
      %v1849 = vunpack.c.l.b16 %v1785
      %v1850 = vunpack.c.l.b16 %v1786
      %v1851 = vunpack.c.l.b16 %v1787
      %v1852 = vunpack.c.l.b16 %v1788
      %v1853 = vunpack.c.l.b16 %v1789
      %v1854 = vunpack.c.l.b16 %v1790
      %v1855 = vunpack.c.l.b16 %v1791
      %v1856 = vunpack.c.l.b16 %v1792
      %v1857 = vunpack.c.l.b16 %v1793
      %v1858 = vunpack.c.l.b16 %v1794
      %v1859 = vunpack.c.l.b16 %v1795
      %v1860 = vunpack.c.l.b16 %v1796
      %v1861 = vunpack.c.l.b16 %v1797
      %v1862 = vunpack.c.l.b16 %v1798
      %v1863 = vunpack.c.l.b16 %v1799
      %v1864 = vunpack.c.l.b16 %v1800
      %v1865 = vunpack.c.l.b16 %v1801
      %v1866 = vunpack.c.l.b16 %v1802
      %v1867 = vunpack.c.l.b16 %v1803
      %v1868 = vunpack.c.l.b16 %v1804
      %v1869 = vunpack.c.l.b16 %v1805
      %v1870 = vunpack.c.l.b16 %v1806
      %v1871 = vunpack.c.l.b16 %v1807
      %v1872 = vpack.c.b16 %v1841, %v1840
      %v1873 = vpack.c.b16 %v1843, %v1842
      %v1874 = vpack.c.b16 %v1845, %v1844
      %v1875 = vpack.c.b16 %v1847, %v1846
      %v1876 = vpack.c.b16 %v1849, %v1848
      %v1877 = vpack.c.b16 %v1851, %v1850
      %v1878 = vpack.c.b16 %v1853, %v1852
      %v1879 = vpack.c.b16 %v1855, %v1854
      %v1880 = vpack.c.b16 %v1857, %v1856
      %v1881 = vpack.c.b16 %v1859, %v1858
      %v1882 = vpack.c.b16 %v1861, %v1860
      %v1883 = vpack.c.b16 %v1863, %v1862
      %v1884 = vpack.c.b16 %v1865, %v1864
      %v1885 = vpack.c.b16 %v1867, %v1866
      %v1886 = vpack.c.b16 %v1869, %v1868
      %v1887 = vpack.c.b16 %v1871, %v1870
      %v1889 = vshrl.u32 %v1872, 16
      %v1891 = vrot.slane %v1889, 7
      %v1892 = vshll.u32 %v1872, 16
      %v1894 = vor.u32 %v1891, %v1892
      %v1896 = vshrl.u32 %v1873, 16
      %v1898 = vrot.slane %v1896, 7
      %v1899 = vshll.u32 %v1873, 16
      %v1901 = vor.u32 %v1898, %v1899
      %v1903 = vshrl.u32 %v1874, 16
      %v1905 = vrot.slane %v1903, 7
      %v1906 = vshll.u32 %v1874, 16
      %v1908 = vor.u32 %v1905, %v1906
      %v1910 = vshrl.u32 %v1875, 16
      %v1912 = vrot.slane %v1910, 7
      %v1913 = vshll.u32 %v1875, 16
      %v1915 = vor.u32 %v1912, %v1913
      %v1917 = vshrl.u32 %v1876, 16
      %v1919 = vrot.slane %v1917, 7
      %v1920 = vshll.u32 %v1876, 16
      %v1922 = vor.u32 %v1919, %v1920
      %v1924 = vshrl.u32 %v1877, 16
      %v1926 = vrot.slane %v1924, 7
      %v1927 = vshll.u32 %v1877, 16
      %v1929 = vor.u32 %v1926, %v1927
      %v1931 = vshrl.u32 %v1878, 16
      %v1933 = vrot.slane %v1931, 7
      %v1934 = vshll.u32 %v1878, 16
      %v1936 = vor.u32 %v1933, %v1934
      %v1938 = vshrl.u32 %v1879, 16
      %v1940 = vrot.slane %v1938, 7
      %v1941 = vshll.u32 %v1879, 16
      %v1943 = vor.u32 %v1940, %v1941
      %v1945 = vshrl.u32 %v1880, 16
      %v1947 = vrot.slane %v1945, 7
      %v1948 = vshll.u32 %v1880, 16
      %v1950 = vor.u32 %v1947, %v1948
      %v1952 = vshrl.u32 %v1881, 16
      %v1954 = vrot.slane %v1952, 7
      %v1955 = vshll.u32 %v1881, 16
      %v1957 = vor.u32 %v1954, %v1955
      %v1959 = vshrl.u32 %v1882, 16
      %v1961 = vrot.slane %v1959, 7
      %v1962 = vshll.u32 %v1882, 16
      %v1964 = vor.u32 %v1961, %v1962
      %v1966 = vshrl.u32 %v1883, 16
      %v1968 = vrot.slane %v1966, 7
      %v1969 = vshll.u32 %v1883, 16
      %v1971 = vor.u32 %v1968, %v1969
      %v1973 = vshrl.u32 %v1884, 16
      %v1975 = vrot.slane %v1973, 7
      %v1976 = vshll.u32 %v1884, 16
      %v1978 = vor.u32 %v1975, %v1976
      %v1980 = vshrl.u32 %v1885, 16
      %v1982 = vrot.slane %v1980, 7
      %v1983 = vshll.u32 %v1885, 16
      %v1985 = vor.u32 %v1982, %v1983
      %v1987 = vshrl.u32 %v1886, 16
      %v1989 = vrot.slane %v1987, 7
      %v1990 = vshll.u32 %v1886, 16
      %v1992 = vor.u32 %v1989, %v1990
      %v1994 = vshrl.u32 %v1887, 16
      %v1996 = vrot.slane %v1994, 7
      %v1997 = vshll.u32 %v1887, 16
      %v1999 = vor.u32 %v1996, %v1997
      %v2032 = vsel %vm439, 0, %v1894
      %v2033 = vsel %vm439, 0, %v1901
      %v2034 = vsel %vm439, 0, %v1908
      %v2035 = vsel %vm439, 0, %v1915
      %v2036 = vsel %vm439, 0, %v1922
      %v2037 = vsel %vm439, 0, %v1929
      %v2038 = vsel %vm439, 0, %v1936
      %v2039 = vsel %vm439, 0, %v1943
      %v2040 = vsel %vm439, 0, %v1950
      %v2041 = vsel %vm439, 0, %v1957
      %v2042 = vsel %vm439, 0, %v1964
      %v2043 = vsel %vm439, 0, %v1971
      %v2044 = vsel %vm439, 0, %v1978
      %v2045 = vsel %vm439, 0, %v1985
      %v2046 = vsel %vm439, 0, %v1992
      %v2047 = vsel %vm439, 0, %v1999
      %v2048 = vsel %vm439, %v1891, 0
      %v2049 = vsel %vm439, %v1898, 0
      %v2050 = vsel %vm439, %v1905, 0
      %v2051 = vsel %vm439, %v1912, 0
      %v2052 = vsel %vm439, %v1919, 0
      %v2053 = vsel %vm439, %v1926, 0
      %v2054 = vsel %vm439, %v1933, 0
      %v2055 = vsel %vm439, %v1940, 0
      %v2056 = vsel %vm439, %v1947, 0
      %v2057 = vsel %vm439, %v1954, 0
      %v2058 = vsel %vm439, %v1961, 0
      %v2059 = vsel %vm439, %v1968, 0
      %v2060 = vsel %vm439, %v1975, 0
      %v2061 = vsel %vm439, %v1982, 0
      %v2062 = vsel %vm439, %v1989, 0
      %v2063 = vsel %vm439, %v1996, 0
      %v2065 = vshrl.u32 %v2032, 16
      %v2067 = vshll.u32 %v2032, 16
      %v2069 = vrot.slane %v2067, 1
      %v2070 = vor.u32 %v2065, %v2069
      %v2072 = vshll.u32 %v2048, 16
      %v2074 = vrot.slane %v2072, 1
      %v2075 = vsel %vm474, %v2070, %v2074
      %v2077 = vshrl.u32 %v2033, 16
      %v2079 = vshll.u32 %v2033, 16
      %v2081 = vrot.slane %v2079, 1
      %v2082 = vor.u32 %v2077, %v2081
      %v2084 = vshll.u32 %v2049, 16
      %v2086 = vrot.slane %v2084, 1
      %v2087 = vsel %vm474, %v2082, %v2086
      %v2089 = vshrl.u32 %v2034, 16
      %v2091 = vshll.u32 %v2034, 16
      %v2093 = vrot.slane %v2091, 1
      %v2094 = vor.u32 %v2089, %v2093
      %v2096 = vshll.u32 %v2050, 16
      %v2098 = vrot.slane %v2096, 1
      %v2099 = vsel %vm474, %v2094, %v2098
      %v2101 = vshrl.u32 %v2035, 16
      %v2103 = vshll.u32 %v2035, 16
      %v2105 = vrot.slane %v2103, 1
      %v2106 = vor.u32 %v2101, %v2105
      %v2108 = vshll.u32 %v2051, 16
      %v2110 = vrot.slane %v2108, 1
      %v2111 = vsel %vm474, %v2106, %v2110
      %v2113 = vshrl.u32 %v2036, 16
      %v2115 = vshll.u32 %v2036, 16
      %v2117 = vrot.slane %v2115, 1
      %v2118 = vor.u32 %v2113, %v2117
      %v2120 = vshll.u32 %v2052, 16
      %v2122 = vrot.slane %v2120, 1
      %v2123 = vsel %vm474, %v2118, %v2122
      %v2125 = vshrl.u32 %v2037, 16
      %v2127 = vshll.u32 %v2037, 16
      %v2129 = vrot.slane %v2127, 1
      %v2130 = vor.u32 %v2125, %v2129
      %v2132 = vshll.u32 %v2053, 16
      %v2134 = vrot.slane %v2132, 1
      %v2135 = vsel %vm474, %v2130, %v2134
      %v2137 = vshrl.u32 %v2038, 16
      %v2139 = vshll.u32 %v2038, 16
      %v2141 = vrot.slane %v2139, 1
      %v2142 = vor.u32 %v2137, %v2141
      %v2144 = vshll.u32 %v2054, 16
      %v2146 = vrot.slane %v2144, 1
      %v2147 = vsel %vm474, %v2142, %v2146
      %v2149 = vshrl.u32 %v2039, 16
      %v2151 = vshll.u32 %v2039, 16
      %v2153 = vrot.slane %v2151, 1
      %v2154 = vor.u32 %v2149, %v2153
      %v2156 = vshll.u32 %v2055, 16
      %v2158 = vrot.slane %v2156, 1
      %v2159 = vsel %vm474, %v2154, %v2158
      %v2161 = vshrl.u32 %v2040, 16
      %v2163 = vshll.u32 %v2040, 16
      %v2165 = vrot.slane %v2163, 1
      %v2166 = vor.u32 %v2161, %v2165
      %v2168 = vshll.u32 %v2056, 16
      %v2170 = vrot.slane %v2168, 1
      %v2171 = vsel %vm474, %v2166, %v2170
      %v2173 = vshrl.u32 %v2041, 16
      %v2175 = vshll.u32 %v2041, 16
      %v2177 = vrot.slane %v2175, 1
      %v2178 = vor.u32 %v2173, %v2177
      %v2180 = vshll.u32 %v2057, 16
      %v2182 = vrot.slane %v2180, 1
      %v2183 = vsel %vm474, %v2178, %v2182
      %v2185 = vshrl.u32 %v2042, 16
      %v2187 = vshll.u32 %v2042, 16
      %v2189 = vrot.slane %v2187, 1
      %v2190 = vor.u32 %v2185, %v2189
      %v2192 = vshll.u32 %v2058, 16
      %v2194 = vrot.slane %v2192, 1
      %v2195 = vsel %vm474, %v2190, %v2194
      %v2197 = vshrl.u32 %v2043, 16
      %v2199 = vshll.u32 %v2043, 16
      %v2201 = vrot.slane %v2199, 1
      %v2202 = vor.u32 %v2197, %v2201
      %v2204 = vshll.u32 %v2059, 16
      %v2206 = vrot.slane %v2204, 1
      %v2207 = vsel %vm474, %v2202, %v2206
      %v2209 = vshrl.u32 %v2044, 16
      %v2211 = vshll.u32 %v2044, 16
      %v2213 = vrot.slane %v2211, 1
      %v2214 = vor.u32 %v2209, %v2213
      %v2216 = vshll.u32 %v2060, 16
      %v2218 = vrot.slane %v2216, 1
      %v2219 = vsel %vm474, %v2214, %v2218
      %v2221 = vshrl.u32 %v2045, 16
      %v2223 = vshll.u32 %v2045, 16
      %v2225 = vrot.slane %v2223, 1
      %v2226 = vor.u32 %v2221, %v2225
      %v2228 = vshll.u32 %v2061, 16
      %v2230 = vrot.slane %v2228, 1
      %v2231 = vsel %vm474, %v2226, %v2230
      %v2233 = vshrl.u32 %v2046, 16
      %v2235 = vshll.u32 %v2046, 16
      %v2237 = vrot.slane %v2235, 1
      %v2238 = vor.u32 %v2233, %v2237
      %v2240 = vshll.u32 %v2062, 16
      %v2242 = vrot.slane %v2240, 1
      %v2243 = vsel %vm474, %v2238, %v2242
      %2244 = vrot.lane.b32.xlu0 %v486, 8
      %v2245 = vpop.permute.xlu0 %2244
      %2246 = vrot.lane.b32.xlu0 %v2075, 8
      %v2247 = vpop.permute.xlu0 %2246
      %2248 = vrot.lane.b32.xlu0 %v2087, 8
      %v2249 = vpop.permute.xlu0 %2248
      %2250 = vrot.lane.b32.xlu0 %v2099, 8
      %v2251 = vpop.permute.xlu0 %2250
      %2252 = vrot.lane.b32.xlu0 %v2111, 8
      %v2253 = vpop.permute.xlu0 %2252
      %2254 = vrot.lane.b32.xlu0 %v2123, 8
      %v2255 = vpop.permute.xlu0 %2254
      %2256 = vrot.lane.b32.xlu0 %v2135, 8
      %v2257 = vpop.permute.xlu0 %2256
      %2258 = vrot.lane.b32.xlu0 %v2147, 8
      %v2259 = vpop.permute.xlu0 %2258
      %2260 = vrot.lane.b32.xlu0 %v2159, 8
      %v2261 = vpop.permute.xlu0 %2260
      %2262 = vrot.lane.b32.xlu0 %v2171, 8
      %v2263 = vpop.permute.xlu0 %2262
      %2264 = vrot.lane.b32.xlu0 %v2183, 8
      %v2265 = vpop.permute.xlu0 %2264
      %2266 = vrot.lane.b32.xlu0 %v2195, 8
      %v2267 = vpop.permute.xlu0 %2266
      %2268 = vrot.lane.b32.xlu0 %v2207, 8
      %v2269 = vpop.permute.xlu0 %2268
      %2270 = vrot.lane.b32.xlu0 %v2219, 8
      %v2271 = vpop.permute.xlu0 %2270
      %2272 = vrot.lane.b32.xlu0 %v2231, 8
      %v2273 = vpop.permute.xlu0 %2272
      %2274 = vrot.lane.b32.xlu0 %v2243, 8
      %v2275 = vpop.permute.xlu0 %2274
      %v2306 = vrot.slane %v2032, 1
      %v2307 = vrot.slane %v2048, 1
      %v2308 = vsel %vm731, %v2306, %v2307
      %v2309 = vrot.slane %v2033, 1
      %v2310 = vrot.slane %v2049, 1
      %v2311 = vsel %vm731, %v2309, %v2310
      %v2312 = vrot.slane %v2034, 1
      %v2313 = vrot.slane %v2050, 1
      %v2314 = vsel %vm731, %v2312, %v2313
      %v2315 = vrot.slane %v2035, 1
      %v2316 = vrot.slane %v2051, 1
      %v2317 = vsel %vm731, %v2315, %v2316
      %v2318 = vrot.slane %v2036, 1
      %v2319 = vrot.slane %v2052, 1
      %v2320 = vsel %vm731, %v2318, %v2319
      %v2321 = vrot.slane %v2037, 1
      %v2322 = vrot.slane %v2053, 1
      %v2323 = vsel %vm731, %v2321, %v2322
      %v2324 = vrot.slane %v2038, 1
      %v2325 = vrot.slane %v2054, 1
      %v2326 = vsel %vm731, %v2324, %v2325
      %v2327 = vrot.slane %v2039, 1
      %v2328 = vrot.slane %v2055, 1
      %v2329 = vsel %vm731, %v2327, %v2328
      %v2330 = vrot.slane %v2040, 1
      %v2331 = vrot.slane %v2056, 1
      %v2332 = vsel %vm731, %v2330, %v2331
      %v2333 = vrot.slane %v2041, 1
      %v2334 = vrot.slane %v2057, 1
      %v2335 = vsel %vm731, %v2333, %v2334
      %v2336 = vrot.slane %v2042, 1
      %v2337 = vrot.slane %v2058, 1
      %v2338 = vsel %vm731, %v2336, %v2337
      %v2339 = vrot.slane %v2043, 1
      %v2340 = vrot.slane %v2059, 1
      %v2341 = vsel %vm731, %v2339, %v2340
      %v2342 = vrot.slane %v2044, 1
      %v2343 = vrot.slane %v2060, 1
      %v2344 = vsel %vm731, %v2342, %v2343
      %v2345 = vrot.slane %v2045, 1
      %v2346 = vrot.slane %v2061, 1
      %v2347 = vsel %vm731, %v2345, %v2346
      %v2348 = vrot.slane %v2046, 1
      %v2349 = vrot.slane %v2062, 1
      %v2350 = vsel %vm731, %v2348, %v2349
      %2351 = vrot.lane.b32.xlu0 %v734, 16
      %v2352 = vpop.permute.xlu0 %2351
      %2353 = vrot.lane.b32.xlu0 %v2308, 16
      %v2354 = vpop.permute.xlu0 %2353
      %2355 = vrot.lane.b32.xlu0 %v2311, 16
      %v2356 = vpop.permute.xlu0 %2355
      %2357 = vrot.lane.b32.xlu0 %v2314, 16
      %v2358 = vpop.permute.xlu0 %2357
      %2359 = vrot.lane.b32.xlu0 %v2317, 16
      %v2360 = vpop.permute.xlu0 %2359
      %2361 = vrot.lane.b32.xlu0 %v2320, 16
      %v2362 = vpop.permute.xlu0 %2361
      %2363 = vrot.lane.b32.xlu0 %v2323, 16
      %v2364 = vpop.permute.xlu0 %2363
      %2365 = vrot.lane.b32.xlu0 %v2326, 16
      %v2366 = vpop.permute.xlu0 %2365
      %2367 = vrot.lane.b32.xlu0 %v2329, 16
      %v2368 = vpop.permute.xlu0 %2367
      %2369 = vrot.lane.b32.xlu0 %v2332, 16
      %v2370 = vpop.permute.xlu0 %2369
      %2371 = vrot.lane.b32.xlu0 %v2335, 16
      %v2372 = vpop.permute.xlu0 %2371
      %2373 = vrot.lane.b32.xlu0 %v2338, 16
      %v2374 = vpop.permute.xlu0 %2373
      %2375 = vrot.lane.b32.xlu0 %v2341, 16
      %v2376 = vpop.permute.xlu0 %2375
      %2377 = vrot.lane.b32.xlu0 %v2344, 16
      %v2378 = vpop.permute.xlu0 %2377
      %2379 = vrot.lane.b32.xlu0 %v2347, 16
      %v2380 = vpop.permute.xlu0 %2379
      %2381 = vrot.lane.b32.xlu0 %v2350, 16
      %v2382 = vpop.permute.xlu0 %2381
      %2384 = vrot.lane.b32.xlu0 %v2032, 24
      %v2385 = vpop.permute.xlu0 %2384
      %2386 = vrot.lane.b32.xlu0 %v2033, 24
      %v2387 = vpop.permute.xlu0 %2386
      %2388 = vrot.lane.b32.xlu0 %v2034, 24
      %v2389 = vpop.permute.xlu0 %2388
      %2390 = vrot.lane.b32.xlu0 %v2035, 24
      %v2391 = vpop.permute.xlu0 %2390
      %2392 = vrot.lane.b32.xlu0 %v2036, 24
      %v2393 = vpop.permute.xlu0 %2392
      %2394 = vrot.lane.b32.xlu0 %v2037, 24
      %v2395 = vpop.permute.xlu0 %2394
      %2396 = vrot.lane.b32.xlu0 %v2038, 24
      %v2397 = vpop.permute.xlu0 %2396
      %2398 = vrot.lane.b32.xlu0 %v2039, 24
      %v2399 = vpop.permute.xlu0 %2398
      %2400 = vrot.lane.b32.xlu0 %v2040, 24
      %v2401 = vpop.permute.xlu0 %2400
      %2402 = vrot.lane.b32.xlu0 %v2041, 24
      %v2403 = vpop.permute.xlu0 %2402
      %2404 = vrot.lane.b32.xlu0 %v2042, 24
      %v2405 = vpop.permute.xlu0 %2404
      %2406 = vrot.lane.b32.xlu0 %v2043, 24
      %v2407 = vpop.permute.xlu0 %2406
      %2408 = vrot.lane.b32.xlu0 %v2044, 24
      %v2409 = vpop.permute.xlu0 %2408
      %2410 = vrot.lane.b32.xlu0 %v2045, 24
      %v2411 = vpop.permute.xlu0 %2410
      %2412 = vrot.lane.b32.xlu0 %v2046, 24
      %v2413 = vpop.permute.xlu0 %2412
      %2414 = vrot.lane.b32.xlu0 %v2047, 24
      %v2415 = vpop.permute.xlu0 %2414
      %v2417 = vshrl.u32 %v2047, 16
      %v2419 = vshll.u32 %v2047, 16
      %v2421 = vrot.slane %v2419, 1
      %v2422 = vor.u32 %v2417, %v2421
      %v2424 = vshll.u32 %v2063, 16
      %v2426 = vrot.slane %v2424, 1
      %v2427 = vsel %vm474, %v2422, %v2426
      %2428 = vrot.lane.b32.xlu0 %v2075, 32
      %v2429 = vpop.permute.xlu0 %2428
      %2430 = vrot.lane.b32.xlu0 %v2087, 32
      %v2431 = vpop.permute.xlu0 %2430
      %2432 = vrot.lane.b32.xlu0 %v2099, 32
      %v2433 = vpop.permute.xlu0 %2432
      %2434 = vrot.lane.b32.xlu0 %v2111, 32
      %v2435 = vpop.permute.xlu0 %2434
      %2436 = vrot.lane.b32.xlu0 %v2123, 32
      %v2437 = vpop.permute.xlu0 %2436
      %2438 = vrot.lane.b32.xlu0 %v2135, 32
      %v2439 = vpop.permute.xlu0 %2438
      %2440 = vrot.lane.b32.xlu0 %v2147, 32
      %v2441 = vpop.permute.xlu0 %2440
      %2442 = vrot.lane.b32.xlu0 %v2159, 32
      %v2443 = vpop.permute.xlu0 %2442
      %2444 = vrot.lane.b32.xlu0 %v2171, 32
      %v2445 = vpop.permute.xlu0 %2444
      %2446 = vrot.lane.b32.xlu0 %v2183, 32
      %v2447 = vpop.permute.xlu0 %2446
      %2448 = vrot.lane.b32.xlu0 %v2195, 32
      %v2449 = vpop.permute.xlu0 %2448
      %2450 = vrot.lane.b32.xlu0 %v2207, 32
      %v2451 = vpop.permute.xlu0 %2450
      %2452 = vrot.lane.b32.xlu0 %v2219, 32
      %v2453 = vpop.permute.xlu0 %2452
      %2454 = vrot.lane.b32.xlu0 %v2231, 32
      %v2455 = vpop.permute.xlu0 %2454
      %2456 = vrot.lane.b32.xlu0 %v2243, 32
      %v2457 = vpop.permute.xlu0 %2456
      %2458 = vrot.lane.b32.xlu0 %v2427, 32
      %v2459 = vpop.permute.xlu0 %2458
      %v2461 = vrot.slane %v2047, 1
      %v2462 = vrot.slane %v2063, 1
      %v2463 = vsel %vm731, %v2461, %v2462
      %2464 = vrot.lane.b32.xlu0 %v2308, 40
      %v2465 = vpop.permute.xlu0 %2464
      %2466 = vrot.lane.b32.xlu0 %v2311, 40
      %v2467 = vpop.permute.xlu0 %2466
      %2468 = vrot.lane.b32.xlu0 %v2314, 40
      %v2469 = vpop.permute.xlu0 %2468
      %2470 = vrot.lane.b32.xlu0 %v2317, 40
      %v2471 = vpop.permute.xlu0 %2470
      %2472 = vrot.lane.b32.xlu0 %v2320, 40
      %v2473 = vpop.permute.xlu0 %2472
      %2474 = vrot.lane.b32.xlu0 %v2323, 40
      %v2475 = vpop.permute.xlu0 %2474
      %2476 = vrot.lane.b32.xlu0 %v2326, 40
      %v2477 = vpop.permute.xlu0 %2476
      %2478 = vrot.lane.b32.xlu0 %v2329, 40
      %v2479 = vpop.permute.xlu0 %2478
      %2480 = vrot.lane.b32.xlu0 %v2332, 40
      %v2481 = vpop.permute.xlu0 %2480
      %2482 = vrot.lane.b32.xlu0 %v2335, 40
      %v2483 = vpop.permute.xlu0 %2482
      %2484 = vrot.lane.b32.xlu0 %v2338, 40
      %v2485 = vpop.permute.xlu0 %2484
      %2486 = vrot.lane.b32.xlu0 %v2341, 40
      %v2487 = vpop.permute.xlu0 %2486
      %2488 = vrot.lane.b32.xlu0 %v2344, 40
      %v2489 = vpop.permute.xlu0 %2488
      %2490 = vrot.lane.b32.xlu0 %v2347, 40
      %v2491 = vpop.permute.xlu0 %2490
      %2492 = vrot.lane.b32.xlu0 %v2350, 40
      %v2493 = vpop.permute.xlu0 %2492
      %2494 = vrot.lane.b32.xlu0 %v2463, 40
      %v2495 = vpop.permute.xlu0 %2494
      %2496 = vrot.lane.b32.xlu0 %v2033, 48
      %v2497 = vpop.permute.xlu0 %2496
      %2498 = vrot.lane.b32.xlu0 %v2034, 48
      %v2499 = vpop.permute.xlu0 %2498
      %2500 = vrot.lane.b32.xlu0 %v2035, 48
      %v2501 = vpop.permute.xlu0 %2500
      %2502 = vrot.lane.b32.xlu0 %v2036, 48
      %v2503 = vpop.permute.xlu0 %2502
      %2504 = vrot.lane.b32.xlu0 %v2037, 48
      %v2505 = vpop.permute.xlu0 %2504
      %2506 = vrot.lane.b32.xlu0 %v2038, 48
      %v2507 = vpop.permute.xlu0 %2506
      %2508 = vrot.lane.b32.xlu0 %v2039, 48
      %v2509 = vpop.permute.xlu0 %2508
      %2510 = vrot.lane.b32.xlu0 %v2040, 48
      %v2511 = vpop.permute.xlu0 %2510
      %2512 = vrot.lane.b32.xlu0 %v2041, 48
      %v2513 = vpop.permute.xlu0 %2512
      %2514 = vrot.lane.b32.xlu0 %v2042, 48
      %v2515 = vpop.permute.xlu0 %2514
      %2516 = vrot.lane.b32.xlu0 %v2043, 48
      %v2517 = vpop.permute.xlu0 %2516
      %2518 = vrot.lane.b32.xlu0 %v2044, 48
      %v2519 = vpop.permute.xlu0 %2518
      %2520 = vrot.lane.b32.xlu0 %v2045, 48
      %v2521 = vpop.permute.xlu0 %2520
      %2522 = vrot.lane.b32.xlu0 %v2046, 48
      %v2523 = vpop.permute.xlu0 %2522
      %2524 = vrot.lane.b32.xlu0 %v2047, 48
      %v2525 = vpop.permute.xlu0 %2524
      %2526 = vrot.lane.b32.xlu0 %v440, 48
      %v2527 = vpop.permute.xlu0 %2526
      %2528 = vrot.lane.b32.xlu0 %v2087, 56
      %v2529 = vpop.permute.xlu0 %2528
      %2530 = vrot.lane.b32.xlu0 %v2099, 56
      %v2531 = vpop.permute.xlu0 %2530
      %2532 = vrot.lane.b32.xlu0 %v2111, 56
      %v2533 = vpop.permute.xlu0 %2532
      %2534 = vrot.lane.b32.xlu0 %v2123, 56
      %v2535 = vpop.permute.xlu0 %2534
      %2536 = vrot.lane.b32.xlu0 %v2135, 56
      %v2537 = vpop.permute.xlu0 %2536
      %2538 = vrot.lane.b32.xlu0 %v2147, 56
      %v2539 = vpop.permute.xlu0 %2538
      %2540 = vrot.lane.b32.xlu0 %v2159, 56
      %v2541 = vpop.permute.xlu0 %2540
      %2542 = vrot.lane.b32.xlu0 %v2171, 56
      %v2543 = vpop.permute.xlu0 %2542
      %2544 = vrot.lane.b32.xlu0 %v2183, 56
      %v2545 = vpop.permute.xlu0 %2544
      %2546 = vrot.lane.b32.xlu0 %v2195, 56
      %v2547 = vpop.permute.xlu0 %2546
      %2548 = vrot.lane.b32.xlu0 %v2207, 56
      %v2549 = vpop.permute.xlu0 %2548
      %2550 = vrot.lane.b32.xlu0 %v2219, 56
      %v2551 = vpop.permute.xlu0 %2550
      %2552 = vrot.lane.b32.xlu0 %v2231, 56
      %v2553 = vpop.permute.xlu0 %2552
      %2554 = vrot.lane.b32.xlu0 %v2243, 56
      %v2555 = vpop.permute.xlu0 %2554
      %2556 = vrot.lane.b32.xlu0 %v2427, 56
      %v2557 = vpop.permute.xlu0 %2556
      %2558 = vrot.lane.b32.xlu0 %v486, 56
      %v2559 = vpop.permute.xlu0 %2558
      %2560 = vrot.lane.b32.xlu0 %v2311, 64
      %v2561 = vpop.permute.xlu0 %2560
      %2562 = vrot.lane.b32.xlu0 %v2314, 64
      %v2563 = vpop.permute.xlu0 %2562
      %2564 = vrot.lane.b32.xlu0 %v2317, 64
      %v2565 = vpop.permute.xlu0 %2564
      %2566 = vrot.lane.b32.xlu0 %v2320, 64
      %v2567 = vpop.permute.xlu0 %2566
      %2568 = vrot.lane.b32.xlu0 %v2323, 64
      %v2569 = vpop.permute.xlu0 %2568
      %2570 = vrot.lane.b32.xlu0 %v2326, 64
      %v2571 = vpop.permute.xlu0 %2570
      %2572 = vrot.lane.b32.xlu0 %v2329, 64
      %v2573 = vpop.permute.xlu0 %2572
      %2574 = vrot.lane.b32.xlu0 %v2332, 64
      %v2575 = vpop.permute.xlu0 %2574
      %2576 = vrot.lane.b32.xlu0 %v2335, 64
      %v2577 = vpop.permute.xlu0 %2576
      %2578 = vrot.lane.b32.xlu0 %v2338, 64
      %v2579 = vpop.permute.xlu0 %2578
      %2580 = vrot.lane.b32.xlu0 %v2341, 64
      %v2581 = vpop.permute.xlu0 %2580
      %2582 = vrot.lane.b32.xlu0 %v2344, 64
      %v2583 = vpop.permute.xlu0 %2582
      %2584 = vrot.lane.b32.xlu0 %v2347, 64
      %v2585 = vpop.permute.xlu0 %2584
      %2586 = vrot.lane.b32.xlu0 %v2350, 64
      %v2587 = vpop.permute.xlu0 %2586
      %2588 = vrot.lane.b32.xlu0 %v2463, 64
      %v2589 = vpop.permute.xlu0 %2588
      %2590 = vrot.lane.b32.xlu0 %v734, 64
      %v2591 = vpop.permute.xlu0 %2590
      %v2593 = vsel %vm1054, %v440, %v2245
      %v2595 = vsel %vm1054, %v2032, %v2247
      %v2597 = vsel %vm1054, %v2033, %v2249
      %v2599 = vsel %vm1054, %v2034, %v2251
      %v2601 = vsel %vm1054, %v2035, %v2253
      %v2603 = vsel %vm1054, %v2036, %v2255
      %v2605 = vsel %vm1054, %v2037, %v2257
      %v2607 = vsel %vm1054, %v2038, %v2259
      %v2609 = vsel %vm1054, %v2039, %v2261
      %v2611 = vsel %vm1054, %v2040, %v2263
      %v2613 = vsel %vm1054, %v2041, %v2265
      %v2615 = vsel %vm1054, %v2042, %v2267
      %v2617 = vsel %vm1054, %v2043, %v2269
      %v2619 = vsel %vm1054, %v2044, %v2271
      %v2621 = vsel %vm1054, %v2045, %v2273
      %v2623 = vsel %vm1054, %v2046, %v2275
      %v2625 = vsel %vm1120, %v2593, %v2352
      %v2627 = vsel %vm1120, %v2595, %v2354
      %v2629 = vsel %vm1120, %v2597, %v2356
      %v2631 = vsel %vm1120, %v2599, %v2358
      %v2633 = vsel %vm1120, %v2601, %v2360
      %v2635 = vsel %vm1120, %v2603, %v2362
      %v2637 = vsel %vm1120, %v2605, %v2364
      %v2639 = vsel %vm1120, %v2607, %v2366
      %v2641 = vsel %vm1120, %v2609, %v2368
      %v2643 = vsel %vm1120, %v2611, %v2370
      %v2645 = vsel %vm1120, %v2613, %v2372
      %v2647 = vsel %vm1120, %v2615, %v2374
      %v2649 = vsel %vm1120, %v2617, %v2376
      %v2651 = vsel %vm1120, %v2619, %v2378
      %v2653 = vsel %vm1120, %v2621, %v2380
      %v2655 = vsel %vm1120, %v2623, %v2382
      %v2657 = vsel %vm1186, %v2625, %v2385
      %v2659 = vsel %vm1186, %v2627, %v2387
      %v2661 = vsel %vm1186, %v2629, %v2389
      %v2663 = vsel %vm1186, %v2631, %v2391
      %v2665 = vsel %vm1186, %v2633, %v2393
      %v2667 = vsel %vm1186, %v2635, %v2395
      %v2669 = vsel %vm1186, %v2637, %v2397
      %v2671 = vsel %vm1186, %v2639, %v2399
      %v2673 = vsel %vm1186, %v2641, %v2401
      %v2675 = vsel %vm1186, %v2643, %v2403
      %v2677 = vsel %vm1186, %v2645, %v2405
      %v2679 = vsel %vm1186, %v2647, %v2407
      %v2681 = vsel %vm1186, %v2649, %v2409
      %v2683 = vsel %vm1186, %v2651, %v2411
      %v2685 = vsel %vm1186, %v2653, %v2413
      %v2687 = vsel %vm1186, %v2655, %v2415
      %v2689 = vsel %vm1252, %v2657, %v2429
      %v2691 = vsel %vm1252, %v2659, %v2431
      %v2693 = vsel %vm1252, %v2661, %v2433
      %v2695 = vsel %vm1252, %v2663, %v2435
      %v2697 = vsel %vm1252, %v2665, %v2437
      %v2699 = vsel %vm1252, %v2667, %v2439
      %v2701 = vsel %vm1252, %v2669, %v2441
      %v2703 = vsel %vm1252, %v2671, %v2443
      %v2705 = vsel %vm1252, %v2673, %v2445
      %v2707 = vsel %vm1252, %v2675, %v2447
      %v2709 = vsel %vm1252, %v2677, %v2449
      %v2711 = vsel %vm1252, %v2679, %v2451
      %v2713 = vsel %vm1252, %v2681, %v2453
      %v2715 = vsel %vm1252, %v2683, %v2455
      %v2717 = vsel %vm1252, %v2685, %v2457
      %v2719 = vsel %vm1252, %v2687, %v2459
      %vm2720 = vcmask 326656
      %v2722 = vsel %vm2720, %v2689, %v2465
      %v2724 = vsel %vm2720, %v2691, %v2467
      %v2726 = vsel %vm2720, %v2693, %v2469
      %v2728 = vsel %vm2720, %v2695, %v2471
      %v2730 = vsel %vm2720, %v2697, %v2473
      %v2732 = vsel %vm2720, %v2699, %v2475
      %v2734 = vsel %vm2720, %v2701, %v2477
      %v2736 = vsel %vm2720, %v2703, %v2479
      %v2738 = vsel %vm2720, %v2705, %v2481
      %v2740 = vsel %vm2720, %v2707, %v2483
      %v2742 = vsel %vm2720, %v2709, %v2485
      %v2744 = vsel %vm2720, %v2711, %v2487
      %v2746 = vsel %vm2720, %v2713, %v2489
      %v2748 = vsel %vm2720, %v2715, %v2491
      %v2750 = vsel %vm2720, %v2717, %v2493
      %v2752 = vsel %vm2720, %v2719, %v2495
      %vm2753 = vcmask 392192
      %v2755 = vsel %vm2753, %v2722, %v2497
      %v2757 = vsel %vm2753, %v2724, %v2499
      %v2759 = vsel %vm2753, %v2726, %v2501
      %v2761 = vsel %vm2753, %v2728, %v2503
      %v2763 = vsel %vm2753, %v2730, %v2505
      %v2765 = vsel %vm2753, %v2732, %v2507
      %v2767 = vsel %vm2753, %v2734, %v2509
      %v2769 = vsel %vm2753, %v2736, %v2511
      %v2771 = vsel %vm2753, %v2738, %v2513
      %v2773 = vsel %vm2753, %v2740, %v2515
      %v2775 = vsel %vm2753, %v2742, %v2517
      %v2777 = vsel %vm2753, %v2744, %v2519
      %v2779 = vsel %vm2753, %v2746, %v2521
      %v2781 = vsel %vm2753, %v2748, %v2523
      %v2783 = vsel %vm2753, %v2750, %v2525
      %v2785 = vsel %vm2753, %v2752, %v2527
      %vm2786 = vcmask 457728
      %v2788 = vsel %vm2786, %v2755, %v2529
      %v2790 = vsel %vm2786, %v2757, %v2531
      %v2792 = vsel %vm2786, %v2759, %v2533
      %v2794 = vsel %vm2786, %v2761, %v2535
      %v2796 = vsel %vm2786, %v2763, %v2537
      %v2798 = vsel %vm2786, %v2765, %v2539
      %v2800 = vsel %vm2786, %v2767, %v2541
      %v2802 = vsel %vm2786, %v2769, %v2543
      %v2804 = vsel %vm2786, %v2771, %v2545
      %v2806 = vsel %vm2786, %v2773, %v2547
      %v2808 = vsel %vm2786, %v2775, %v2549
      %v2810 = vsel %vm2786, %v2777, %v2551
      %v2812 = vsel %vm2786, %v2779, %v2553
      %v2814 = vsel %vm2786, %v2781, %v2555
      %v2816 = vsel %vm2786, %v2783, %v2557
      %v2818 = vsel %vm2786, %v2785, %v2559
      %vm2819 = vcmask 523264
      %v2821 = vsel %vm2819, %v2788, %v2561
      %v2823 = vsel %vm2819, %v2790, %v2563
      %v2825 = vsel %vm2819, %v2792, %v2565
      %v2827 = vsel %vm2819, %v2794, %v2567
      %v2829 = vsel %vm2819, %v2796, %v2569
      %v2831 = vsel %vm2819, %v2798, %v2571
      %v2833 = vsel %vm2819, %v2800, %v2573
      %v2835 = vsel %vm2819, %v2802, %v2575
      %v2837 = vsel %vm2819, %v2804, %v2577
      %v2839 = vsel %vm2819, %v2806, %v2579
      %v2841 = vsel %vm2819, %v2808, %v2581
      %v2843 = vsel %vm2819, %v2810, %v2583
      %v2845 = vsel %vm2819, %v2812, %v2585
      %v2847 = vsel %vm2819, %v2814, %v2587
      %v2849 = vsel %vm2819, %v2816, %v2589
      %v2851 = vsel %vm2819, %v2818, %v2591
      %v2852 = vld [vmem:[%s2] sm:$0xf]
      %v2853 = vld [vmem:[%s2 + $0x4] sm:$0xf]
      %v2854 = vld [vmem:[%s2 + $0x8] sm:$0xf]
      %v2855 = vld [vmem:[%s2 + $0xc] sm:$0xf]
      %v2856 = vld [vmem:[%s2 + $0x10] sm:$0xf]
      %v2857 = vld [vmem:[%s2 + $0x14] sm:$0xf]
      %v2858 = vld [vmem:[%s2 + $0x18] sm:$0xf]
      %v2859 = vld [vmem:[%s2 + $0x1c] sm:$0xf]
      %v2860 = vld [vmem:[%s2 + $0x20] sm:$0xf]
      %v2870 = vunpack.c.l.b16 %v2852
      %v2871 = vunpack.c.l.b16 %v2853
      %v2872 = vunpack.c.l.b16 %v2854
      %v2873 = vunpack.c.l.b16 %v2855
      %v2874 = vunpack.c.l.b16 %v2856
      %v2875 = vunpack.c.l.b16 %v2857
      %v2876 = vunpack.c.l.b16 %v2858
      %v2877 = vunpack.c.l.b16 %v2859
      %v2878 = vunpack.c.l.b16 %v2860
      %v2879 = vpack.c.b16 %v2871, %v2870
      %v2880 = vpack.c.b16 %v2873, %v2872
      %v2881 = vpack.c.b16 %v2875, %v2874
      %v2882 = vpack.c.b16 %v2877, %v2876
      %v2883 = vpack.c.b16 %v2878, %v2878
      %vm2888 = vcmask 588800
      %v2889 = vsel %vm2888, %v2821, 0
      %v2891 = vsel %vm2888, %v2823, 0
      %v2893 = vsel %vm2888, %v2825, 0
      %v2895 = vsel %vm2888, %v2827, 0
      %v2897 = vsel %vm2888, %v2829, 0
      %v2899 = vsel %vm2888, %v2831, 0
      %v2901 = vsel %vm2888, %v2833, 0
      %v2903 = vsel %vm2888, %v2835, 0
      %v2905 = vsel %vm2888, %v2837, 0
      %v2907 = vsel %vm2888, %v2839, 0
      %v2909 = vsel %vm2888, %v2841, 0
      %v2911 = vsel %vm2888, %v2843, 0
      %v2913 = vsel %vm2888, %v2845, 0
      %v2915 = vsel %vm2888, %v2847, 0
      %v2917 = vsel %vm2888, %v2849, 0
      %v2919 = vsel %vm2888, %v2851, 0
      %vm2921 = vcmask 1043456
      %v2923 = vsel %vm2921, %v2883, 0
      %2925 = vmatpush.bf16.msra.mxu0 0
      %2926 = vmatpush.bf16.msra.mxu0 0
      %2927 = vmatpush.bf16.msra.mxu0 0
      %2928 = vmatpush.bf16.msra.mxu0 %v2923
      %2929 = vmatpush.bf16.msra.mxu0 %v2882
      %2930 = vmatpush.bf16.msra.mxu0 %v2881
      %2931 = vmatpush.bf16.msra.mxu0 %v2880
      %2932 = vmatpush.bf16.msra.mxu0 %v2879
      %2933 = vmatmul.bf16.gmra.mxu0 %v2889
      %v2934 = vpop.f32.mrf.mxu0
      %v2935 = vadd.f32 0.0, %v2934
      %v2936 = vpop.f32.mrf.mxu0
      %v2937 = vadd.f32 0.0, %v2936
      %2938 = vmatmul.bf16.gmra.mxu0 %v2891
      %v2939 = vpop.f32.mrf.mxu0
      %v2940 = vadd.f32 0.0, %v2939
      %v2941 = vpop.f32.mrf.mxu0
      %v2942 = vadd.f32 0.0, %v2941
      %2943 = vmatmul.bf16.gmra.mxu0 %v2893
      %v2944 = vpop.f32.mrf.mxu0
      %v2945 = vadd.f32 0.0, %v2944
      %v2946 = vpop.f32.mrf.mxu0
      %v2947 = vadd.f32 0.0, %v2946
      %2948 = vmatmul.bf16.gmra.mxu0 %v2895
      %v2949 = vpop.f32.mrf.mxu0
      %v2950 = vadd.f32 0.0, %v2949
      %v2951 = vpop.f32.mrf.mxu0
      %v2952 = vadd.f32 0.0, %v2951
      %2953 = vmatmul.bf16.gmra.mxu0 %v2897
      %v2954 = vpop.f32.mrf.mxu0
      %v2955 = vadd.f32 0.0, %v2954
      %v2956 = vpop.f32.mrf.mxu0
      %v2957 = vadd.f32 0.0, %v2956
      %2958 = vmatmul.bf16.gmra.mxu0 %v2899
      %v2959 = vpop.f32.mrf.mxu0
      %v2960 = vadd.f32 0.0, %v2959
      %v2961 = vpop.f32.mrf.mxu0
      %v2962 = vadd.f32 0.0, %v2961
      %2963 = vmatmul.bf16.gmra.mxu0 %v2901
      %v2964 = vpop.f32.mrf.mxu0
      %v2965 = vadd.f32 0.0, %v2964
      %v2966 = vpop.f32.mrf.mxu0
      %v2967 = vadd.f32 0.0, %v2966
      %2968 = vmatmul.bf16.gmra.mxu0 %v2903
      %v2969 = vpop.f32.mrf.mxu0
      %v2970 = vadd.f32 0.0, %v2969
      %v2971 = vpop.f32.mrf.mxu0
      %v2972 = vadd.f32 0.0, %v2971
      %2973 = vmatmul.bf16.gmra.mxu0 %v2905
      %v2974 = vpop.f32.mrf.mxu0
      %v2975 = vadd.f32 0.0, %v2974
      %v2976 = vpop.f32.mrf.mxu0
      %v2977 = vadd.f32 0.0, %v2976
      %2978 = vmatmul.bf16.gmra.mxu0 %v2907
      %v2979 = vpop.f32.mrf.mxu0
      %v2980 = vadd.f32 0.0, %v2979
      %v2981 = vpop.f32.mrf.mxu0
      %v2982 = vadd.f32 0.0, %v2981
      %2983 = vmatmul.bf16.gmra.mxu0 %v2909
      %v2984 = vpop.f32.mrf.mxu0
      %v2985 = vadd.f32 0.0, %v2984
      %v2986 = vpop.f32.mrf.mxu0
      %v2987 = vadd.f32 0.0, %v2986
      %2988 = vmatmul.bf16.gmra.mxu0 %v2911
      %v2989 = vpop.f32.mrf.mxu0
      %v2990 = vadd.f32 0.0, %v2989
      %v2991 = vpop.f32.mrf.mxu0
      %v2992 = vadd.f32 0.0, %v2991
      %2993 = vmatmul.bf16.gmra.mxu0 %v2913
      %v2994 = vpop.f32.mrf.mxu0
      %v2995 = vadd.f32 0.0, %v2994
      %v2996 = vpop.f32.mrf.mxu0
      %v2997 = vadd.f32 0.0, %v2996
      %2998 = vmatmul.bf16.gmra.mxu0 %v2915
      %v2999 = vpop.f32.mrf.mxu0
      %v3000 = vadd.f32 0.0, %v2999
      %v3001 = vpop.f32.mrf.mxu0
      %v3002 = vadd.f32 0.0, %v3001
      %3003 = vmatmul.bf16.gmra.mxu0 %v2917
      %v3004 = vpop.f32.mrf.mxu0
      %v3005 = vadd.f32 0.0, %v3004
      %v3006 = vpop.f32.mrf.mxu0
      %v3007 = vadd.f32 0.0, %v3006
      %3008 = vmatmul.bf16.gmra.mxu0 %v2919
      %v3009 = vpop.f32.mrf.mxu0
      %v3010 = vadd.f32 0.0, %v3009
      %v3011 = vpop.f32.mrf.mxu0
      %v3012 = vadd.f32 0.0, %v3011
      %3013 = vdwg.mxu0
      %v3014 = vsel %vm1054, %v2935, 0.0
      %v3015 = vsel %vm1054, %v2937, 0.0
      %v3016 = vadd.f32 %v3014, %v3015
      %v3017 = vsel %vm1054, %v2940, 0.0
      %v3018 = vadd.f32 %v3016, %v3017
      %v3019 = vsel %vm1054, %v2942, 0.0
      %v3020 = vadd.f32 %v3018, %v3019
      %v3021 = vsel %vm1054, %v2945, 0.0
      %v3022 = vadd.f32 %v3020, %v3021
      %v3023 = vsel %vm1054, %v2947, 0.0
      %v3024 = vadd.f32 %v3022, %v3023
      %v3025 = vsel %vm1054, %v2950, 0.0
      %v3026 = vadd.f32 %v3024, %v3025
      %v3027 = vsel %vm1054, %v2952, 0.0
      %v3028 = vadd.f32 %v3026, %v3027
      %v3029 = vsel %vm1054, %v2955, 0.0
      %v3030 = vadd.f32 %v3028, %v3029
      %v3031 = vsel %vm1054, %v2957, 0.0
      %v3032 = vadd.f32 %v3030, %v3031
      %v3033 = vsel %vm1054, %v2960, 0.0
      %v3034 = vadd.f32 %v3032, %v3033
      %v3035 = vsel %vm1054, %v2962, 0.0
      %v3036 = vadd.f32 %v3034, %v3035
      %v3037 = vsel %vm1054, %v2965, 0.0
      %v3038 = vadd.f32 %v3036, %v3037
      %v3039 = vsel %vm1054, %v2967, 0.0
      %v3040 = vadd.f32 %v3038, %v3039
      %v3041 = vsel %vm1054, %v2970, 0.0
      %v3042 = vadd.f32 %v3040, %v3041
      %v3043 = vsel %vm1054, %v2972, 0.0
      %v3044 = vadd.f32 %v3042, %v3043
      %v3045 = vsel %vm1054, %v2975, 0.0
      %v3046 = vadd.f32 %v3044, %v3045
      %v3047 = vsel %vm1054, %v2977, 0.0
      %v3048 = vadd.f32 %v3046, %v3047
      %v3049 = vsel %vm1054, %v2980, 0.0
      %v3050 = vadd.f32 %v3048, %v3049
      %v3051 = vsel %vm1054, %v2982, 0.0
      %v3052 = vadd.f32 %v3050, %v3051
      %v3053 = vsel %vm1054, %v2985, 0.0
      %v3054 = vadd.f32 %v3052, %v3053
      %v3055 = vsel %vm1054, %v2987, 0.0
      %v3056 = vadd.f32 %v3054, %v3055
      %v3057 = vsel %vm1054, %v2990, 0.0
      %v3058 = vadd.f32 %v3056, %v3057
      %v3059 = vsel %vm1054, %v2992, 0.0
      %v3060 = vadd.f32 %v3058, %v3059
      %v3061 = vsel %vm1054, %v2995, 0.0
      %v3062 = vadd.f32 %v3060, %v3061
      %v3063 = vsel %vm1054, %v2997, 0.0
      %v3064 = vadd.f32 %v3062, %v3063
      %v3065 = vsel %vm1054, %v3000, 0.0
      %v3066 = vadd.f32 %v3064, %v3065
      %v3067 = vsel %vm1054, %v3002, 0.0
      %v3068 = vadd.f32 %v3066, %v3067
      %v3069 = vsel %vm1054, %v3005, 0.0
      %v3070 = vadd.f32 %v3068, %v3069
      %v3071 = vsel %vm1054, %v3007, 0.0
      %v3072 = vadd.f32 %v3070, %v3071
      %v3073 = vsel %vm1054, %v3010, 0.0
      %v3074 = vadd.f32 %v3072, %v3073
      %v3075 = vsel %vm1054, %v3012, 0.0
      %v3076 = vadd.f32 %v3074, %v3075
      %v3077 = vrot.slane %v3076, 4
      %v3078 = vadd.f32 %v3076, %v3077
      %v3079 = vrot.slane %v3078, 2
      %v3080 = vadd.f32 %v3078, %v3079
      %v3081 = vrot.slane %v3080, 1
      %v3082 = vadd.f32 %v3080, %v3081
      %v3083 = vmul.f32 %v3082, 0.00390625
      %v3084 = vmul.f32 %v2935, %v2935
      %v3085 = vmul.f32 %v2937, %v2937
      %v3086 = vmul.f32 %v2940, %v2940
      %v3087 = vmul.f32 %v2942, %v2942
      %v3088 = vmul.f32 %v2945, %v2945
      %v3089 = vmul.f32 %v2947, %v2947
      %v3090 = vmul.f32 %v2950, %v2950
      %v3091 = vmul.f32 %v2952, %v2952
      %v3092 = vmul.f32 %v2955, %v2955
      %v3093 = vmul.f32 %v2957, %v2957
      %v3094 = vmul.f32 %v2960, %v2960
      %v3095 = vmul.f32 %v2962, %v2962
      %v3096 = vmul.f32 %v2965, %v2965
      %v3097 = vmul.f32 %v2967, %v2967
      %v3098 = vmul.f32 %v2970, %v2970
      %v3099 = vmul.f32 %v2972, %v2972
      %v3100 = vmul.f32 %v2975, %v2975
      %v3101 = vmul.f32 %v2977, %v2977
      %v3102 = vmul.f32 %v2980, %v2980
      %v3103 = vmul.f32 %v2982, %v2982
      %v3104 = vmul.f32 %v2985, %v2985
      %v3105 = vmul.f32 %v2987, %v2987
      %v3106 = vmul.f32 %v2990, %v2990
      %v3107 = vmul.f32 %v2992, %v2992
      %v3108 = vmul.f32 %v2995, %v2995
      %v3109 = vmul.f32 %v2997, %v2997
      %v3110 = vmul.f32 %v3000, %v3000
      %v3111 = vmul.f32 %v3002, %v3002
      %v3112 = vmul.f32 %v3005, %v3005
      %v3113 = vmul.f32 %v3007, %v3007
      %v3114 = vmul.f32 %v3010, %v3010
      %v3115 = vmul.f32 %v3012, %v3012
      %v3116 = vsel %vm1054, %v3084, 0.0
      %v3117 = vsel %vm1054, %v3085, 0.0
      %v3118 = vadd.f32 %v3116, %v3117
      %v3119 = vsel %vm1054, %v3086, 0.0
      %v3120 = vadd.f32 %v3118, %v3119
      %v3121 = vsel %vm1054, %v3087, 0.0
      %v3122 = vadd.f32 %v3120, %v3121
      %v3123 = vsel %vm1054, %v3088, 0.0
      %v3124 = vadd.f32 %v3122, %v3123
      %v3125 = vsel %vm1054, %v3089, 0.0
      %v3126 = vadd.f32 %v3124, %v3125
      %v3127 = vsel %vm1054, %v3090, 0.0
      %v3128 = vadd.f32 %v3126, %v3127
      %v3129 = vsel %vm1054, %v3091, 0.0
      %v3130 = vadd.f32 %v3128, %v3129
      %v3131 = vsel %vm1054, %v3092, 0.0
      %v3132 = vadd.f32 %v3130, %v3131
      %v3133 = vsel %vm1054, %v3093, 0.0
      %v3134 = vadd.f32 %v3132, %v3133
      %v3135 = vsel %vm1054, %v3094, 0.0
      %v3136 = vadd.f32 %v3134, %v3135
      %v3137 = vsel %vm1054, %v3095, 0.0
      %v3138 = vadd.f32 %v3136, %v3137
      %v3139 = vsel %vm1054, %v3096, 0.0
      %v3140 = vadd.f32 %v3138, %v3139
      %v3141 = vsel %vm1054, %v3097, 0.0
      %v3142 = vadd.f32 %v3140, %v3141
      %v3143 = vsel %vm1054, %v3098, 0.0
      %v3144 = vadd.f32 %v3142, %v3143
      %v3145 = vsel %vm1054, %v3099, 0.0
      %v3146 = vadd.f32 %v3144, %v3145
      %v3147 = vsel %vm1054, %v3100, 0.0
      %v3148 = vadd.f32 %v3146, %v3147
      %v3149 = vsel %vm1054, %v3101, 0.0
      %v3150 = vadd.f32 %v3148, %v3149
      %v3151 = vsel %vm1054, %v3102, 0.0
      %v3152 = vadd.f32 %v3150, %v3151
      %v3153 = vsel %vm1054, %v3103, 0.0
      %v3154 = vadd.f32 %v3152, %v3153
      %v3155 = vsel %vm1054, %v3104, 0.0
      %v3156 = vadd.f32 %v3154, %v3155
      %v3157 = vsel %vm1054, %v3105, 0.0
      %v3158 = vadd.f32 %v3156, %v3157
      %v3159 = vsel %vm1054, %v3106, 0.0
      %v3160 = vadd.f32 %v3158, %v3159
      %v3161 = vsel %vm1054, %v3107, 0.0
      %v3162 = vadd.f32 %v3160, %v3161
      %v3163 = vsel %vm1054, %v3108, 0.0
      %v3164 = vadd.f32 %v3162, %v3163
      %v3165 = vsel %vm1054, %v3109, 0.0
      %v3166 = vadd.f32 %v3164, %v3165
      %v3167 = vsel %vm1054, %v3110, 0.0
      %v3168 = vadd.f32 %v3166, %v3167
      %v3169 = vsel %vm1054, %v3111, 0.0
      %v3170 = vadd.f32 %v3168, %v3169
      %v3171 = vsel %vm1054, %v3112, 0.0
      %v3172 = vadd.f32 %v3170, %v3171
      %v3173 = vsel %vm1054, %v3113, 0.0
      %v3174 = vadd.f32 %v3172, %v3173
      %v3175 = vsel %vm1054, %v3114, 0.0
      %v3176 = vadd.f32 %v3174, %v3175
      %v3177 = vsel %vm1054, %v3115, 0.0
      %v3178 = vadd.f32 %v3176, %v3177
      %v3179 = vrot.slane %v3178, 4
      %v3180 = vadd.f32 %v3178, %v3179
      %v3181 = vrot.slane %v3180, 2
      %v3182 = vadd.f32 %v3180, %v3181
      %v3183 = vrot.slane %v3182, 1
      %v3184 = vadd.f32 %v3182, %v3183
      %v3185 = vmul.f32 %v3184, 0.00390625
      %v3186 = vmul.f32 %v3083, %v3083
      %v3187 = vsub.f32 %v3185, %v3186
      %v3188 = vsub.f32 %v2935, %v3083
      %v3189 = vsub.f32 %v2937, %v3083
      %v3190 = vsub.f32 %v2940, %v3083
      %v3191 = vsub.f32 %v2942, %v3083
      %v3192 = vsub.f32 %v2945, %v3083
      %v3193 = vsub.f32 %v2947, %v3083
      %v3194 = vsub.f32 %v2950, %v3083
      %v3195 = vsub.f32 %v2952, %v3083
      %v3196 = vsub.f32 %v2955, %v3083
      %v3197 = vsub.f32 %v2957, %v3083
      %v3198 = vsub.f32 %v2960, %v3083
      %v3199 = vsub.f32 %v2962, %v3083
      %v3200 = vsub.f32 %v2965, %v3083
      %v3201 = vsub.f32 %v2967, %v3083
      %v3202 = vsub.f32 %v2970, %v3083
      %v3203 = vsub.f32 %v2972, %v3083
      %v3204 = vsub.f32 %v2975, %v3083
      %v3205 = vsub.f32 %v2977, %v3083
      %v3206 = vsub.f32 %v2980, %v3083
      %v3207 = vsub.f32 %v2982, %v3083
      %v3208 = vsub.f32 %v2985, %v3083
      %v3209 = vsub.f32 %v2987, %v3083
      %v3210 = vsub.f32 %v2990, %v3083
      %v3211 = vsub.f32 %v2992, %v3083
      %v3212 = vsub.f32 %v2995, %v3083
      %v3213 = vsub.f32 %v2997, %v3083
      %v3214 = vsub.f32 %v3000, %v3083
      %v3215 = vsub.f32 %v3002, %v3083
      %v3216 = vsub.f32 %v3005, %v3083
      %v3217 = vsub.f32 %v3007, %v3083
      %v3218 = vsub.f32 %v3010, %v3083
      %v3219 = vsub.f32 %v3012, %v3083
      %v3220 = vadd.f32 %v3187, 1e-05
      %v3221 = vrsqrt.pop %v3220
      %v3222 = vmul.f32 %v3221, %v3220
      %v3223 = vmul.f32 %v3222, %v3221
      %v3224 = vmul.f32 0.5, %v3223
      %v3225 = vsub.f32 1.5, %v3224
      %v3226 = vmul.f32 %v3221, %v3225
      %vm3227 = vweird.f32 %v3220
      %vm3228 = vweird.f32 %v3221
      %vm3229 = vmor %vm3227, %vm3228
      %v3230 = vsel %vm3229, %v3221, %v3226
      %v3231 = vmul.f32 %v3188, %v3230
      %v3232 = vmul.f32 %v3189, %v3230
      %v3233 = vmul.f32 %v3190, %v3230
      %v3234 = vmul.f32 %v3191, %v3230
      %v3235 = vmul.f32 %v3192, %v3230
      %v3236 = vmul.f32 %v3193, %v3230
      %v3237 = vmul.f32 %v3194, %v3230
      %v3238 = vmul.f32 %v3195, %v3230
      %v3239 = vmul.f32 %v3196, %v3230
      %v3240 = vmul.f32 %v3197, %v3230
      %v3241 = vmul.f32 %v3198, %v3230
      %v3242 = vmul.f32 %v3199, %v3230
      %v3243 = vmul.f32 %v3200, %v3230
      %v3244 = vmul.f32 %v3201, %v3230
      %v3245 = vmul.f32 %v3202, %v3230
      %v3246 = vmul.f32 %v3203, %v3230
      %v3247 = vmul.f32 %v3204, %v3230
      %v3248 = vmul.f32 %v3205, %v3230
      %v3249 = vmul.f32 %v3206, %v3230
      %v3250 = vmul.f32 %v3207, %v3230
      %v3251 = vmul.f32 %v3208, %v3230
      %v3252 = vmul.f32 %v3209, %v3230
      %v3253 = vmul.f32 %v3210, %v3230
      %v3254 = vmul.f32 %v3211, %v3230
      %v3255 = vmul.f32 %v3212, %v3230
      %v3256 = vmul.f32 %v3213, %v3230
      %v3257 = vmul.f32 %v3214, %v3230
      %v3258 = vmul.f32 %v3215, %v3230
      %v3259 = vmul.f32 %v3216, %v3230
      %v3260 = vmul.f32 %v3217, %v3230
      %v3261 = vmul.f32 %v3218, %v3230
      %v3262 = vmul.f32 %v3219, %v3230
      %vm3263 = vcmp.ge.f32.partialorder %v3231, 0.0
      %vm3264 = vcmp.ge.f32.partialorder %v3232, 0.0
      %vm3265 = vcmp.ge.f32.partialorder %v3233, 0.0
      %vm3266 = vcmp.ge.f32.partialorder %v3234, 0.0
      %vm3267 = vcmp.ge.f32.partialorder %v3235, 0.0
      %vm3268 = vcmp.ge.f32.partialorder %v3236, 0.0
      %vm3269 = vcmp.ge.f32.partialorder %v3237, 0.0
      %vm3270 = vcmp.ge.f32.partialorder %v3238, 0.0
      %vm3271 = vcmp.ge.f32.partialorder %v3239, 0.0
      %vm3272 = vcmp.ge.f32.partialorder %v3240, 0.0
      %vm3273 = vcmp.ge.f32.partialorder %v3241, 0.0
      %vm3274 = vcmp.ge.f32.partialorder %v3242, 0.0
      %vm3275 = vcmp.ge.f32.partialorder %v3243, 0.0
      %vm3276 = vcmp.ge.f32.partialorder %v3244, 0.0
      %vm3277 = vcmp.ge.f32.partialorder %v3245, 0.0
      %vm3278 = vcmp.ge.f32.partialorder %v3246, 0.0
      %vm3279 = vcmp.ge.f32.partialorder %v3247, 0.0
      %vm3280 = vcmp.ge.f32.partialorder %v3248, 0.0
      %vm3281 = vcmp.ge.f32.partialorder %v3249, 0.0
      %vm3282 = vcmp.ge.f32.partialorder %v3250, 0.0
      %vm3283 = vcmp.ge.f32.partialorder %v3251, 0.0
      %vm3284 = vcmp.ge.f32.partialorder %v3252, 0.0
      %vm3285 = vcmp.ge.f32.partialorder %v3253, 0.0
      %vm3286 = vcmp.ge.f32.partialorder %v3254, 0.0
      %vm3287 = vcmp.ge.f32.partialorder %v3255, 0.0
      %vm3288 = vcmp.ge.f32.partialorder %v3256, 0.0
      %vm3289 = vcmp.ge.f32.partialorder %v3257, 0.0
      %vm3290 = vcmp.ge.f32.partialorder %v3258, 0.0
      %vm3291 = vcmp.ge.f32.partialorder %v3259, 0.0
      %vm3292 = vcmp.ge.f32.partialorder %v3260, 0.0
      %vm3293 = vcmp.ge.f32.partialorder %v3261, 0.0
      %vm3294 = vcmp.ge.f32.partialorder %v3262, 0.0
      %v3295 = vmul.f32 %v3231, 0.2
      %v3296 = vmul.f32 %v3232, 0.2
      %v3297 = vmul.f32 %v3233, 0.2
      %v3298 = vmul.f32 %v3234, 0.2
      %v3299 = vmul.f32 %v3235, 0.2
      %v3300 = vmul.f32 %v3236, 0.2
      %v3301 = vmul.f32 %v3237, 0.2
      %v3302 = vmul.f32 %v3238, 0.2
      %v3303 = vmul.f32 %v3239, 0.2
      %v3304 = vmul.f32 %v3240, 0.2
      %v3305 = vmul.f32 %v3241, 0.2
      %v3306 = vmul.f32 %v3242, 0.2
      %v3307 = vmul.f32 %v3243, 0.2
      %v3308 = vmul.f32 %v3244, 0.2
      %v3309 = vmul.f32 %v3245, 0.2
      %v3310 = vmul.f32 %v3246, 0.2
      %v3311 = vmul.f32 %v3247, 0.2
      %v3312 = vmul.f32 %v3248, 0.2
      %v3313 = vmul.f32 %v3249, 0.2
      %v3314 = vmul.f32 %v3250, 0.2
      %v3315 = vmul.f32 %v3251, 0.2
      %v3316 = vmul.f32 %v3252, 0.2
      %v3317 = vmul.f32 %v3253, 0.2
      %v3318 = vmul.f32 %v3254, 0.2
      %v3319 = vmul.f32 %v3255, 0.2
      %v3320 = vmul.f32 %v3256, 0.2
      %v3321 = vmul.f32 %v3257, 0.2
      %v3322 = vmul.f32 %v3258, 0.2
      %v3323 = vmul.f32 %v3259, 0.2
      %v3324 = vmul.f32 %v3260, 0.2
      %v3325 = vmul.f32 %v3261, 0.2
      %v3326 = vmul.f32 %v3262, 0.2
      %v3327 = vsel %vm3263, %v3231, %v3295
      %v3328 = vsel %vm3264, %v3232, %v3296
      %v3329 = vsel %vm3265, %v3233, %v3297
      %v3330 = vsel %vm3266, %v3234, %v3298
      %v3331 = vsel %vm3267, %v3235, %v3299
      %v3332 = vsel %vm3268, %v3236, %v3300
      %v3333 = vsel %vm3269, %v3237, %v3301
      %v3334 = vsel %vm3270, %v3238, %v3302
      %v3335 = vsel %vm3271, %v3239, %v3303
      %v3336 = vsel %vm3272, %v3240, %v3304
      %v3337 = vsel %vm3273, %v3241, %v3305
      %v3338 = vsel %vm3274, %v3242, %v3306
      %v3339 = vsel %vm3275, %v3243, %v3307
      %v3340 = vsel %vm3276, %v3244, %v3308
      %v3341 = vsel %vm3277, %v3245, %v3309
      %v3342 = vsel %vm3278, %v3246, %v3310
      %v3343 = vsel %vm3279, %v3247, %v3311
      %v3344 = vsel %vm3280, %v3248, %v3312
      %v3345 = vsel %vm3281, %v3249, %v3313
      %v3346 = vsel %vm3282, %v3250, %v3314
      %v3347 = vsel %vm3283, %v3251, %v3315
      %v3348 = vsel %vm3284, %v3252, %v3316
      %v3349 = vsel %vm3285, %v3253, %v3317
      %v3350 = vsel %vm3286, %v3254, %v3318
      %v3351 = vsel %vm3287, %v3255, %v3319
      %v3352 = vsel %vm3288, %v3256, %v3320
      %v3353 = vsel %vm3289, %v3257, %v3321
      %v3354 = vsel %vm3290, %v3258, %v3322
      %v3355 = vsel %vm3291, %v3259, %v3323
      %v3356 = vsel %vm3292, %v3260, %v3324
      %v3357 = vsel %vm3293, %v3261, %v3325
      %v3358 = vsel %vm3294, %v3262, %v3326
      %3359 = vst.msk [vmem:[%s170] sm:$0xff] %vm1054, %v3327
      %3360 = vst.msk [vmem:[%s170 + $0x8] sm:$0xff] %vm1054, %v3328
      %3361 = vst.msk [vmem:[%s170 + $0x10] sm:$0xff] %vm1054, %v3329
      %3362 = vst.msk [vmem:[%s170 + $0x18] sm:$0xff] %vm1054, %v3330
      %3363 = vst.msk [vmem:[%s170 + $0x20] sm:$0xff] %vm1054, %v3331
      %3364 = vst.msk [vmem:[%s170 + $0x28] sm:$0xff] %vm1054, %v3332
      %3365 = vst.msk [vmem:[%s170 + $0x30] sm:$0xff] %vm1054, %v3333
      %3366 = vst.msk [vmem:[%s170 + $0x38] sm:$0xff] %vm1054, %v3334
      %3367 = vst.msk [vmem:[%s170 + $0x40] sm:$0xff] %vm1054, %v3335
      %3368 = vst.msk [vmem:[%s170 + $0x48] sm:$0xff] %vm1054, %v3336
      %3369 = vst.msk [vmem:[%s170 + $0x50] sm:$0xff] %vm1054, %v3337
      %3370 = vst.msk [vmem:[%s170 + $0x58] sm:$0xff] %vm1054, %v3338
      %3371 = vst.msk [vmem:[%s170 + $0x60] sm:$0xff] %vm1054, %v3339
      %3372 = vst.msk [vmem:[%s170 + $0x68] sm:$0xff] %vm1054, %v3340
      %3373 = vst.msk [vmem:[%s170 + $0x70] sm:$0xff] %vm1054, %v3341
      %3374 = vst.msk [vmem:[%s170 + $0x78] sm:$0xff] %vm1054, %v3342
      %3375 = vst.msk [vmem:[%s170 + $0x80] sm:$0xff] %vm1054, %v3343
      %3376 = vst.msk [vmem:[%s170 + $0x88] sm:$0xff] %vm1054, %v3344
      %3377 = vst.msk [vmem:[%s170 + $0x90] sm:$0xff] %vm1054, %v3345
      %3378 = vst.msk [vmem:[%s170 + $0x98] sm:$0xff] %vm1054, %v3346
      %3379 = vst.msk [vmem:[%s170 + $0xa0] sm:$0xff] %vm1054, %v3347
      %3380 = vst.msk [vmem:[%s170 + $0xa8] sm:$0xff] %vm1054, %v3348
      %3381 = vst.msk [vmem:[%s170 + $0xb0] sm:$0xff] %vm1054, %v3349
      %3382 = vst.msk [vmem:[%s170 + $0xb8] sm:$0xff] %vm1054, %v3350
      %3383 = vst.msk [vmem:[%s170 + $0xc0] sm:$0xff] %vm1054, %v3351
      %3384 = vst.msk [vmem:[%s170 + $0xc8] sm:$0xff] %vm1054, %v3352
      %3385 = vst.msk [vmem:[%s170 + $0xd0] sm:$0xff] %vm1054, %v3353
      %3386 = vst.msk [vmem:[%s170 + $0xd8] sm:$0xff] %vm1054, %v3354
      %3387 = vst.msk [vmem:[%s170 + $0xe0] sm:$0xff] %vm1054, %v3355
      %3388 = vst.msk [vmem:[%s170 + $0xe8] sm:$0xff] %vm1054, %v3356
      %3389 = vst.msk [vmem:[%s170 + $0xf0] sm:$0xff] %vm1054, %v3357
      %3390 = vst.msk [vmem:[%s170 + $0xf8] sm:$0xff] %vm1054, %v3358
      %p3391 = scmp.lt.s32.totalorder %s14, 1
      %s3392 = scalar_select %p3391, %s14, 1
      %s3393 = smul.addr %s3392, 32
      %s3394 = smul.addr %s3393, 8
      %s3395 = scalar_lea.vmem %s3, %s3394
      // Predicated region
      $region33: #{conv_block.1} parent=31 // pred_check
        %p3396 = pneg %p100
      $region34: #{conv_block.1} parent=31 // pred_check_branch
        %3398 = sbr.rel (%p3396) target = $region36
      $region35: #{conv_block.1} parent=31 // pred_region
        _
      $region36: #{conv_block.1} parent=31 // pred_fallthru
        _
    $region32: #{conv_block.1} parent=5 // pred_fallthru
      _
    %p3399 = scmp.le.s32.totalorder 2, %s9
    // Predicated region
    $region37: #{conv_block.1} parent=5 // pred_check
      %p3400 = pneg %p3399
    $region38: #{conv_block.1} parent=5 // pred_check_branch
      %3402 = sbr.rel (%p3400) target = $region40
    $region39: #{conv_block.1} parent=5 // pred_region
      %s3403 = ssub.s32 %s9, 2
      // Predicated region
      $region41: #{conv_block.1} parent=39 // pred_check
        %p3404 = pneg %p106
      $region42: #{conv_block.1} parent=39 // pred_check_branch
        %3406 = sbr.rel (%p3404) target = $region44
      $region43: #{conv_block.1} parent=39 // pred_region
        %p3407 = scmp.lt.s32.totalorder %s15, 1
        %s3408 = scalar_select %p3407, %s15, 1
        %s3409 = smul.addr %s3408, 32
        %s3410 = smul.addr %s3409, 8
        %s3411 = scalar_lea.vmem %s3, %s3410
      $region44: #{conv_block.1} parent=39 // pred_fallthru
        _
    $region40: #{conv_block.1} parent=5 // pred_fallthru
      _
  $region6: #{conv_block.1} parent=0 // loop_footer
    %s13 = sadd.s32 1, %s9
  $region7: #{conv_block.1} parent=0 // loop_footer_branch
    %8 = sbr.rel target = $region3
  $region8: #{conv_block.1} parent=0 // loop_exit
    _

</llo_original>
